<compile_context>
chip_gen: v6e
topology: v6e:2x2x1
jax: 0.10.0
libtpu: 0.0.40
codegen_flags: <defaults>
</compile_context>

<pallas_src>
import jax
import jax.numpy as jnp
from jax.experimental import pallas as pl
from jax.experimental.pallas import tpu as pltpu

NEG_SLOPE = 0.01  # torch.nn.LeakyReLU default


def _leaky(x):
    return jnp.where(x >= 0, x, x * NEG_SLOPE)


def _act_dtype_for_device():
    """bf16 activation chain only on chips with a bf16 VPU (v6e / v7x)."""
    try:
        kind = jax.devices()[0].device_kind.lower()
    except Exception:  # pragma: no cover - be safe, fall back to f32
        return jnp.float32
    if ("v6" in kind) or ("v7" in kind) or ("7x" in kind):
        return jnp.bfloat16
    return jnp.float32


# ------------------------------- the kernel ----------------------------------

def make_sfo_kernel(act_dtype):
    f32, bf16 = jnp.float32, jnp.bfloat16

    def _mxu(v):  # cast for MXU operands; identity when the chain is already bf16
        return v if v.dtype == bf16 else v.astype(bf16)

    def sfo_kernel(x_ref, yc_ref, wbig_ref, wtail_ref, b_ref, preds_ref, dprob_ref):
        K = yc_ref.shape[0]
        N = x_ref.shape[0] - K

        def dot(a, w):
            return jnp.dot(a, w, preferred_element_type=act_dtype)

        # LeakyReLU on the raw features (shared by both nets), then the fused
        # 256->512 first layer of both nets, split into its x_c / x_q halves.
        h = _mxu(_leaky(x_ref[...]))                          # (N+K, 256)
        aq = dot(h[0:N], wbig_ref[256:512, :])                # (N, 512)  x_q rows of fused W1
        ac = dot(h[N:N + K], wbig_ref[0:256, :])              # (K, 512)  x_c rows of fused W1

        # All K*N (support, query) pairs at once, k-major rows (row = k*N + n):
        # one broadcast-add + reshape instead of K broadcasts + a sublane concat.
        pre = (ac[:, None, :] + aq[None, :, :]).reshape(K * N, 512) + b_ref[0:1, :]

        d0 = pre[:, 0:256]        # direction-net layer-1 pre-activation
        s0 = pre[:, 256:512]      # similarity-net layer-1 pre-activation (dprob part added later)

        # --- direction_net tail: 256 -> 128 -> 64 -> 32 -> 6 ---
        a = _mxu(_leaky(d0))
        a = _mxu(_leaky(dot(a, wtail_ref[0:256, :]) + b_ref[1:2, 0:128]))
        a = _mxu(_leaky(dot(a, wtail_ref[512:640, 0:64]) + b_ref[3:4, 0:64]))
        a = _mxu(_leaky(dot(a, wtail_ref[768:832, 0:32]) + b_ref[5:6, 0:32]))
        dv = dot(a, wtail_ref[896:928, 0:6]) + b_ref[7:8, 0:6]            # (K*N, 6)

        delta = dv[:, 0:2].astype(f32)                                    # (K*N, 2)
        logits = dv[:, 2:6].astype(f32)
        ex = jnp.exp(logits - jnp.max(logits, axis=1, keepdims=True))
        dprob = ex * pl.reciprocal(jnp.sum(ex, axis=1, keepdims=True), approx=True)  # (K*N, 4)

        # direction_probs as one lane-contiguous (N, K*4) slab: out[n, k*4 + c].
        dprob_ref[...] = jnp.concatenate(
            [dprob[k * N:(k + 1) * N, :] for k in range(K)], axis=1)

        # --- similarity_net on cat([embedding, dprob]).
        # NOTE: leaky(cat(E, p)) == cat(leaky(E), p) only because p = softmax(...) >= 0
        # (LeakyReLU is the identity on it) — do not change the activation blindly.
        s = s0 + dot(_mxu(dprob), wbig_ref[512:516, 256:512])
        a = _mxu(_leaky(s))
        a = _mxu(_leaky(dot(a, wtail_ref[256:512, :]) + b_ref[2:3, 0:128]))
        a = _mxu(_leaky(dot(a, wtail_ref[640:768, 0:64]) + b_ref[4:5, 0:64]))
        a = _mxu(_leaky(dot(a, wtail_ref[832:896, 0:32]) + b_ref[6:7, 0:32]))
        sim = (dot(a, wtail_ref[928:960, 0:1]) + b_ref[8:9, 0:1]).astype(f32)  # (K*N, 1)

        # --- AttentionalClassify: collapsed epilogue on an (N, K) tile.
        sim_nk = jnp.concatenate(
            [sim[k * N:(k + 1) * N, :] for k in range(K)], axis=1)        # (N, K)
        p = jnp.exp(sim_nk - jnp.max(sim_nk, axis=1, keepdims=True))
        att = p * pl.reciprocal(jnp.sum(p, axis=1, keepdims=True), approx=True)  # (N, K)

        # y_s = y_c[k] + delta, laid out as two (N, K) tiles (x and y components).
        ysx = jnp.concatenate(
            [delta[k * N:(k + 1) * N, 0:1] + yc_ref[k, 0] for k in range(K)], axis=1)
        ysy = jnp.concatenate(
            [delta[k * N:(k + 1) * N, 1:2] + yc_ref[k, 1] for k in range(K)], axis=1)
        preds_ref[...] = jnp.concatenate(
            [jnp.sum(att * ysx, axis=1, keepdims=True),
             jnp.sum(att * ysy, axis=1, keepdims=True)], axis=1)          # (N, 2)

    return sfo_kernel


# ----------------------------- wrapper / params ------------------------------

def _linear_params(key, fan_in, fan_out):
    kw, kb = jax.random.split(key)
    bound = 1.0 / float(fan_in) ** 0.5
    w = jax.random.uniform(kw, (fan_in, fan_out), jnp.float32, -bound, bound)
    b = jax.random.uniform(kb, (1, fan_out), jnp.float32, -bound, bound)
    return w, b


def init_params(key):
    keys = jax.random.split(key, 10)
    dir_shapes = [(512, 256), (256, 128), (128, 64), (64, 32), (32, 6)]
    sim_shapes = [(516, 256), (256, 128), (128, 64), (64, 32), (32, 1)]
    dnet = [_linear_params(keys[i], fi, fo) for i, (fi, fo) in enumerate(dir_shapes)]
    snet = [_linear_params(keys[5 + i], fi, fo) for i, (fi, fo) in enumerate(sim_shapes)]
    return dnet, snet


def pack_params(dnet, snet, act_dtype=None):
    """Pack the 20 per-layer tensors into 3 kernel slabs (2 bf16 weights + 1 bias)."""
    if act_dtype is None:
        act_dtype = _act_dtype_for_device()
    bf16 = jnp.bfloat16
    (wd1, bd1), (wd2, bd2), (wd3, bd3), (wd4, bd4), (wd5, bd5) = dnet
    (ws1, bs1), (ws2, bs2), (ws3, bs3), (ws4, bs4), (ws5, bs5) = snet

    # Fused layer-1 slab (520, 512): rows 0:256 = x_c rows, 256:512 = x_q rows,
    # columns 0:256 = direction net, 256:512 = similarity net; rows 512:516 hold the
    # dprob rows of the similarity net's first layer (in its column block).
    w1 = jnp.concatenate([wd1, ws1[:512]], axis=1)                        # (512, 512)
    w1p_pad = jnp.zeros((8, 512), jnp.float32).at[0:4, 256:512].set(ws1[512:516])
    wbig = jnp.concatenate([w1, w1p_pad], axis=0).astype(bf16)            # (520, 512)

    # Tail slab (960, 128): every tail weight zero-padded to 128 lanes.
    def pad128(w):
        return jnp.zeros((w.shape[0], 128), jnp.float32).at[:, :w.shape[1]].set(w)

    wtail = jnp.concatenate(
        [pad128(wd2), pad128(ws2),      # rows   0:256, 256:512
         pad128(wd3), pad128(ws3),      # rows 512:640, 640:768
         pad128(wd4), pad128(ws4),      # rows 768:832, 832:896
         pad128(wd5), pad128(ws5)],     # rows 896:928, 928:960
        axis=0).astype(bf16)                                              # (960, 128)

    # Bias slab (9, 512): row 0 = fused b1 [dir | sim]; rows 1..8 = per-layer biases,
    # each starting at lane 0 (zero padded).
    def padrow(b):
        return jnp.zeros((1, 512), jnp.float32).at[:, :b.shape[1]].set(b)

    b1 = jnp.concatenate([bd1, bs1], axis=1)                              # (1, 512)
    biases = jnp.concatenate(
        [b1, padrow(bd2), padrow(bs2), padrow(bd3), padrow(bs3),
         padrow(bd4), padrow(bs4), padrow(bd5), padrow(bs5)], axis=0).astype(act_dtype)

    return wbig, wtail, biases


def sfo_forward(x_q, x_c, y_c, packed):
    """x_q: (N, 256) query features, x_c: (K, 256) calibration features, y_c: (1, K, 2).
    Returns (y_q (N, 2), direction_probs (N, K, 4))."""
    N, K = x_q.shape[0], x_c.shape[0]
    wbig, wtail, biases = packed
    act_dtype = biases.dtype  # f32 on v5e-and-older, bf16 on v6e/v7x

    x = jnp.concatenate([x_q.astype(jnp.float32), x_c.astype(jnp.float32)], axis=0)
    yc = y_c[0].astype(jnp.float32)

    vmem = lambda: pl.BlockSpec(memory_space=pltpu.MemorySpace.VMEM)
    smem = lambda: pl.BlockSpec(memory_space=pltpu.MemorySpace.SMEM)

    preds, dprob_flat = pl.pallas_call(
        make_sfo_kernel(act_dtype),
        out_shape=(jax.ShapeDtypeStruct((N, 2), jnp.float32),
                   jax.ShapeDtypeStruct((N, K * 4), jnp.float32)),
        in_specs=[vmem(), smem(), vmem(), vmem(), vmem()],
        out_specs=(vmem(), vmem()),
    )(x, yc, wbig, wtail, biases)
    return preds, dprob_flat.reshape(N, K, 4)


# ----------------------------- pure-JAX reference ----------------------------

def sfo_reference(x_q, x_c, y_c, dnet, snet):
    hp = jax.lax.Precision.HIGHEST

    def run_net(x, layers):
        a = _leaky(x)
        for i, (w, b) in enumerate(layers):
            a = jnp.dot(a, w, precision=hp) + b
            if i < len(layers) - 1:
                a = _leaky(a)
        return a

    N, K = x_q.shape[0], x_c.shape[0]
    sims, y_ss, dprobs = [], [], []
    for k in range(K):
        emb = jnp.concatenate(
            [jnp.broadcast_to(x_c[k][None, :], (N, x_c.shape[1])), x_q], axis=1)
        dv = run_net(emb, dnet)
        delta = dv[:, :2]
        dprob = jax.nn.softmax(dv[:, 2:6], axis=1)
        sim = run_net(jnp.concatenate([emb, dprob], axis=1), snet)
        sims.append(sim)
        dprobs.append(dprob)
        y_ss.append(y_c[0, k] + delta)
    sims = jnp.stack(sims)                       # (K, N, 1)
    att = jax.nn.softmax(sims, axis=0)
    y_s = jnp.stack(y_ss)                        # (K, N, 2)
    y_q = jnp.sum(att * y_s, axis=0)             # (N, 2)
    direction_probs = jnp.transpose(jnp.stack(dprobs), (1, 0, 2))   # (N, K, 4)
    return y_q, direction_probs


def stand_in_feature_extractor(left_eye, right_eye, face, rects, key):
    # TODO(synk): feature_extractor() is not defined in the reference module; using a
    # deterministic linear projection to 256-dim features as a stand-in (plain JAX glue).
    n = left_eye.shape[0]
    flat = jnp.concatenate(
        [left_eye.reshape(n, -1), right_eye.reshape(n, -1),
         face.reshape(n, -1), rects.reshape(n, -1)], axis=1)
    w = jax.random.normal(key, (flat.shape[1], 256), jnp.float32) * 0.02
    return jnp.tanh(flat @ w)


if __name__ == "__main__":
    key = jax.random.PRNGKey(0)
    (k_params, k_feat, k_left, k_right,
     k_face, k_rects, k_calib, k_yc) = jax.random.split(key, 8)

    N, K = 8, 4   # query batch, number of calibration/support points
    left_eye = jax.random.normal(k_left, (N, 3, 16, 16), jnp.float32)
    right_eye = jax.random.normal(k_right, (N, 3, 16, 16), jnp.float32)
    face = jax.random.normal(k_face, (N, 3, 16, 16), jnp.float32)
    rects = jax.random.normal(k_rects, (N, 12), jnp.float32)
    calibration_features = jax.random.normal(k_calib, (K, 256), jnp.float32)
    y_c = jax.random.normal(k_yc, (1, K, 2), jnp.float32)

    dnet, snet = init_params(k_params)
    packed = pack_params(dnet, snet)
    x_q = stand_in_feature_extractor(left_eye, right_eye, face, rects, k_feat)

    fwd = jax.jit(sfo_forward)
    y_q, direction_probs = fwd(x_q, calibration_features, y_c, packed)
    jax.block_until_ready((y_q, direction_probs))

    assert y_q.shape == (N, 2)
    assert direction_probs.shape == (N, K, 4)
    assert bool(jnp.all(jnp.isfinite(y_q)))
    assert bool(jnp.all(jnp.isfinite(direction_probs)))

    # Loose numerical check against an exact-f32 pure-JAX reference (kernel uses bf16
    # MXU operands with f32/bf16 accumulation and approx reciprocals, so tolerances
    # are generous but meaningful).
    y_ref, dp_ref = sfo_reference(x_q, calibration_features, y_c, dnet, snet)
    assert float(jnp.max(jnp.abs(y_q - y_ref))) < 1e-1
    assert float(jnp.max(jnp.abs(direction_probs - dp_ref))) < 5e-2

    print("KERNEL_OK")
</pallas_src>

<mosaic_0001>
module attributes {stable_mosaic.version = 11 : i64} {
  func.func @sfo_kernel(%arg0: memref<12x256xf32, #tpu.memory_space<vmem>>, %arg1: memref<4x2xf32, #tpu.memory_space<smem>>, %arg2: memref<520x512xbf16, #tpu.memory_space<vmem>>, %arg3: memref<960x128xbf16, #tpu.memory_space<vmem>>, %arg4: memref<9x512xf32, #tpu.memory_space<vmem>>, %arg5: memref<8x2xf32, #tpu.memory_space<vmem>>, %arg6: memref<8x16xf32, #tpu.memory_space<vmem>>) attributes {dimension_semantics = [], scalar_prefetch = 0 : i64, scratch_operands = 0 : i64, tpu.core_type = #tpu.core_type<tc>} {
    %c0 = arith.constant 0 : index
    %c0_0 = arith.constant 0 : index
    %0 = vector.load %arg0[%c0, %c0_0] : memref<12x256xf32, #tpu.memory_space<vmem>>, vector<12x256xf32>
    %cst = arith.constant 0.000000e+00 : f32
    %1 = vector.broadcast %cst : f32 to vector<12x256xf32>
    %2 = arith.cmpf oge, %0, %1 : vector<12x256xf32>
    %cst_1 = arith.constant 0.00999999977 : f32
    %3 = vector.broadcast %cst_1 : f32 to vector<12x256xf32>
    %4 = arith.mulf %0, %3 : vector<12x256xf32>
    %5 = arith.select %2, %0, %4 : vector<12x256xi1>, vector<12x256xf32>
    %6 = arith.truncf %5 : vector<12x256xf32> to vector<12x256xbf16>
    %7 = vector.extract_strided_slice %6 {offsets = [0, 0], sizes = [8, 256], strides = [1, 1]} : vector<12x256xbf16> to vector<8x256xbf16>
    %c256 = arith.constant 256 : index
    %c0_2 = arith.constant 0 : index
    %8 = vector.load %arg2[%c256, %c0_2] : memref<520x512xbf16, #tpu.memory_space<vmem>>, vector<256x512xbf16>
    %cst_3 = arith.constant dense<0.000000e+00> : vector<8x512xf32>
    %9 = tpu.matmul %7, %8, %cst_3 {dimension_numbers = #tpu.dot_dimension_numbers<[1], [0], [0], [1], [0, 0, 1, 1], [], []>} : vector<8x256xbf16>, vector<256x512xbf16>, vector<8x512xf32> -> vector<8x512xf32>
    %10 = vector.extract_strided_slice %6 {offsets = [8, 0], sizes = [4, 256], strides = [1, 1]} : vector<12x256xbf16> to vector<4x256xbf16>
    %c0_4 = arith.constant 0 : index
    %c0_5 = arith.constant 0 : index
    %11 = vector.load %arg2[%c0_4, %c0_5] : memref<520x512xbf16, #tpu.memory_space<vmem>>, vector<256x512xbf16>
    %cst_6 = arith.constant dense<0.000000e+00> : vector<4x512xf32>
    %12 = tpu.matmul %10, %11, %cst_6 {dimension_numbers = #tpu.dot_dimension_numbers<[1], [0], [0], [1], [0, 0, 1, 1], [], []>} : vector<4x256xbf16>, vector<256x512xbf16>, vector<4x512xf32> -> vector<4x512xf32>
    %13 = vector.shape_cast %12 : vector<4x512xf32> to vector<4x1x512xf32>
    %14 = vector.shape_cast %9 : vector<8x512xf32> to vector<1x8x512xf32>
    %15 = vector.broadcast %13 : vector<4x1x512xf32> to vector<4x8x512xf32>
    %16 = vector.broadcast %14 : vector<1x8x512xf32> to vector<4x8x512xf32>
    %17 = arith.addf %15, %16 : vector<4x8x512xf32>
    %18 = vector.shape_cast %17 : vector<4x8x512xf32> to vector<32x512xf32>
    %c0_7 = arith.constant 0 : index
    %c0_8 = arith.constant 0 : index
    %19 = vector.load %arg4[%c0_7, %c0_8] : memref<9x512xf32, #tpu.memory_space<vmem>>, vector<1x512xf32>
    %20 = vector.broadcast %19 : vector<1x512xf32> to vector<32x512xf32>
    %21 = arith.addf %18, %20 : vector<32x512xf32>
    %22 = vector.extract_strided_slice %21 {offsets = [0, 0], sizes = [32, 256], strides = [1, 1]} : vector<32x512xf32> to vector<32x256xf32>
    %23 = vector.extract_strided_slice %21 {offsets = [0, 256], sizes = [32, 256], strides = [1, 1]} : vector<32x512xf32> to vector<32x256xf32>
    %cst_9 = arith.constant 0.000000e+00 : f32
    %24 = vector.broadcast %cst_9 : f32 to vector<32x256xf32>
    %25 = arith.cmpf oge, %22, %24 : vector<32x256xf32>
    %cst_10 = arith.constant 0.00999999977 : f32
    %26 = vector.broadcast %cst_10 : f32 to vector<32x256xf32>
    %27 = arith.mulf %22, %26 : vector<32x256xf32>
    %28 = arith.select %25, %22, %27 : vector<32x256xi1>, vector<32x256xf32>
    %29 = arith.truncf %28 : vector<32x256xf32> to vector<32x256xbf16>
    %c0_11 = arith.constant 0 : index
    %c0_12 = arith.constant 0 : index
    %30 = vector.load %arg3[%c0_11, %c0_12] : memref<960x128xbf16, #tpu.memory_space<vmem>>, vector<256x128xbf16>
    %cst_13 = arith.constant dense<0.000000e+00> : vector<32x128xf32>
    %31 = tpu.matmul %29, %30, %cst_13 {dimension_numbers = #tpu.dot_dimension_numbers<[1], [0], [0], [1], [0, 0, 1, 1], [], []>} : vector<32x256xbf16>, vector<256x128xbf16>, vector<32x128xf32> -> vector<32x128xf32>
    %c1 = arith.constant 1 : index
    %c0_14 = arith.constant 0 : index
    %32 = vector.load %arg4[%c1, %c0_14] : memref<9x512xf32, #tpu.memory_space<vmem>>, vector<1x128xf32>
    %33 = vector.broadcast %32 : vector<1x128xf32> to vector<32x128xf32>
    %34 = arith.addf %31, %33 : vector<32x128xf32>
    %cst_15 = arith.constant 0.000000e+00 : f32
    %35 = vector.broadcast %cst_15 : f32 to vector<32x128xf32>
    %36 = arith.cmpf oge, %34, %35 : vector<32x128xf32>
    %cst_16 = arith.constant 0.00999999977 : f32
    %37 = vector.broadcast %cst_16 : f32 to vector<32x128xf32>
    %38 = arith.mulf %34, %37 : vector<32x128xf32>
    %39 = arith.select %36, %34, %38 : vector<32x128xi1>, vector<32x128xf32>
    %40 = arith.truncf %39 : vector<32x128xf32> to vector<32x128xbf16>
    %c512 = arith.constant 512 : index
    %c0_17 = arith.constant 0 : index
    %41 = vector.load %arg3[%c512, %c0_17] : memref<960x128xbf16, #tpu.memory_space<vmem>>, vector<128x64xbf16>
    %cst_18 = arith.constant dense<0.000000e+00> : vector<32x64xf32>
    %42 = tpu.matmul %40, %41, %cst_18 {dimension_numbers = #tpu.dot_dimension_numbers<[1], [0], [0], [1], [0, 0, 1, 1], [], []>} : vector<32x128xbf16>, vector<128x64xbf16>, vector<32x64xf32> -> vector<32x64xf32>
    %c3 = arith.constant 3 : index
    %c0_19 = arith.constant 0 : index
    %43 = vector.load %arg4[%c3, %c0_19] : memref<9x512xf32, #tpu.memory_space<vmem>>, vector<1x64xf32>
    %44 = vector.broadcast %43 : vector<1x64xf32> to vector<32x64xf32>
    %45 = arith.addf %42, %44 : vector<32x64xf32>
    %cst_20 = arith.constant 0.000000e+00 : f32
    %46 = vector.broadcast %cst_20 : f32 to vector<32x64xf32>
    %47 = arith.cmpf oge, %45, %46 : vector<32x64xf32>
    %cst_21 = arith.constant 0.00999999977 : f32
    %48 = vector.broadcast %cst_21 : f32 to vector<32x64xf32>
    %49 = arith.mulf %45, %48 : vector<32x64xf32>
    %50 = arith.select %47, %45, %49 : vector<32x64xi1>, vector<32x64xf32>
    %51 = arith.truncf %50 : vector<32x64xf32> to vector<32x64xbf16>
    %c768 = arith.constant 768 : index
    %c0_22 = arith.constant 0 : index
    %52 = vector.load %arg3[%c768, %c0_22] : memref<960x128xbf16, #tpu.memory_space<vmem>>, vector<64x32xbf16>
    %cst_23 = arith.constant dense<0.000000e+00> : vector<32x32xf32>
    %53 = tpu.matmul %51, %52, %cst_23 {dimension_numbers = #tpu.dot_dimension_numbers<[1], [0], [0], [1], [0, 0, 1, 1], [], []>} : vector<32x64xbf16>, vector<64x32xbf16>, vector<32x32xf32> -> vector<32x32xf32>
    %c5 = arith.constant 5 : index
    %c0_24 = arith.constant 0 : index
    %54 = vector.load %arg4[%c5, %c0_24] : memref<9x512xf32, #tpu.memory_space<vmem>>, vector<1x32xf32>
    %55 = vector.broadcast %54 : vector<1x32xf32> to vector<32x32xf32>
    %56 = arith.addf %53, %55 : vector<32x32xf32>
    %cst_25 = arith.constant 0.000000e+00 : f32
    %57 = vector.broadcast %cst_25 : f32 to vector<32x32xf32>
    %58 = arith.cmpf oge, %56, %57 : vector<32x32xf32>
    %cst_26 = arith.constant 0.00999999977 : f32
    %59 = vector.broadcast %cst_26 : f32 to vector<32x32xf32>
    %60 = arith.mulf %56, %59 : vector<32x32xf32>
    %61 = arith.select %58, %56, %60 : vector<32x32xi1>, vector<32x32xf32>
    %62 = arith.truncf %61 : vector<32x32xf32> to vector<32x32xbf16>
    %c896 = arith.constant 896 : index
    %c0_27 = arith.constant 0 : index
    %63 = vector.load %arg3[%c896, %c0_27] : memref<960x128xbf16, #tpu.memory_space<vmem>>, vector<32x6xbf16>
    %cst_28 = arith.constant dense<0.000000e+00> : vector<32x6xf32>
    %64 = tpu.matmul %62, %63, %cst_28 {dimension_numbers = #tpu.dot_dimension_numbers<[1], [0], [0], [1], [0, 0, 1, 1], [], []>} : vector<32x32xbf16>, vector<32x6xbf16>, vector<32x6xf32> -> vector<32x6xf32>
    %c7 = arith.constant 7 : index
    %c0_29 = arith.constant 0 : index
    %65 = vector.load %arg4[%c7, %c0_29] : memref<9x512xf32, #tpu.memory_space<vmem>>, vector<1x6xf32>
    %66 = vector.broadcast %65 : vector<1x6xf32> to vector<32x6xf32>
    %67 = arith.addf %64, %66 : vector<32x6xf32>
    %68 = vector.extract_strided_slice %67 {offsets = [0, 0], sizes = [32, 2], strides = [1, 1]} : vector<32x6xf32> to vector<32x2xf32>
    %69 = vector.extract_strided_slice %67 {offsets = [0, 2], sizes = [32, 4], strides = [1, 1]} : vector<32x6xf32> to vector<32x4xf32>
    %cst_30 = arith.constant dense<0xFF800000> : vector<32xf32>
    %70 = vector.multi_reduction <maximumf>, %69, %cst_30 [1] : vector<32x4xf32> to vector<32xf32>
    %71 = vector.shape_cast %70 : vector<32xf32> to vector<32x1xf32>
    %72 = vector.broadcast %71 : vector<32x1xf32> to vector<32x4xf32>
    %73 = arith.subf %69, %72 : vector<32x4xf32>
    %74 = math.exp %73 : vector<32x4xf32>
    %cst_31 = arith.constant dense<0.000000e+00> : vector<32xf32>
    %75 = vector.multi_reduction <add>, %74, %cst_31 [1] : vector<32x4xf32> to vector<32xf32>
    %76 = vector.shape_cast %75 : vector<32xf32> to vector<32x1xf32>
    %77 = tpu.reciprocal %76 {approx = true} : vector<32x1xf32> -> vector<32x1xf32>
    %78 = vector.broadcast %77 : vector<32x1xf32> to vector<32x4xf32>
    %79 = arith.mulf %74, %78 : vector<32x4xf32>
    %80 = vector.extract_strided_slice %79 {offsets = [0, 0], sizes = [8, 4], strides = [1, 1]} : vector<32x4xf32> to vector<8x4xf32>
    %81 = vector.extract_strided_slice %79 {offsets = [8, 0], sizes = [8, 4], strides = [1, 1]} : vector<32x4xf32> to vector<8x4xf32>
    %82 = vector.extract_strided_slice %79 {offsets = [16, 0], sizes = [8, 4], strides = [1, 1]} : vector<32x4xf32> to vector<8x4xf32>
    %83 = vector.extract_strided_slice %79 {offsets = [24, 0], sizes = [8, 4], strides = [1, 1]} : vector<32x4xf32> to vector<8x4xf32>
    %84 = tpu.concatenate %80, %81, %82, %83 in 1 : vector<8x4xf32>, vector<8x4xf32>, vector<8x4xf32>, vector<8x4xf32> -> vector<8x16xf32>
    %c0_32 = arith.constant 0 : index
    %c0_33 = arith.constant 0 : index
    %85 = vector.load %arg6[%c0_32, %c0_33] : memref<8x16xf32, #tpu.memory_space<vmem>>, vector<8x16xf32>
    tpu.vector_store %arg6[%c0_32, %c0_33], %84 {strides = array<i32>} : memref<8x16xf32, #tpu.memory_space<vmem>>, vector<8x16xf32>,
    %86 = arith.truncf %79 : vector<32x4xf32> to vector<32x4xbf16>
    %c512_34 = arith.constant 512 : index
    %c256_35 = arith.constant 256 : index
    %87 = vector.load %arg2[%c512_34, %c256_35] : memref<520x512xbf16, #tpu.memory_space<vmem>>, vector<4x256xbf16>
    %cst_36 = arith.constant dense<0.000000e+00> : vector<32x256xf32>
    %88 = tpu.matmul %86, %87, %cst_36 {dimension_numbers = #tpu.dot_dimension_numbers<[1], [0], [0], [1], [0, 0, 1, 1], [], []>} : vector<32x4xbf16>, vector<4x256xbf16>, vector<32x256xf32> -> vector<32x256xf32>
    %89 = arith.addf %23, %88 : vector<32x256xf32>
    %cst_37 = arith.constant 0.000000e+00 : f32
    %90 = vector.broadcast %cst_37 : f32 to vector<32x256xf32>
    %91 = arith.cmpf oge, %89, %90 : vector<32x256xf32>
    %cst_38 = arith.constant 0.00999999977 : f32
    %92 = vector.broadcast %cst_38 : f32 to vector<32x256xf32>
    %93 = arith.mulf %89, %92 : vector<32x256xf32>
    %94 = arith.select %91, %89, %93 : vector<32x256xi1>, vector<32x256xf32>
    %95 = arith.truncf %94 : vector<32x256xf32> to vector<32x256xbf16>
    %c256_39 = arith.constant 256 : index
    %c0_40 = arith.constant 0 : index
    %96 = vector.load %arg3[%c256_39, %c0_40] : memref<960x128xbf16, #tpu.memory_space<vmem>>, vector<256x128xbf16>
    %cst_41 = arith.constant dense<0.000000e+00> : vector<32x128xf32>
    %97 = tpu.matmul %95, %96, %cst_41 {dimension_numbers = #tpu.dot_dimension_numbers<[1], [0], [0], [1], [0, 0, 1, 1], [], []>} : vector<32x256xbf16>, vector<256x128xbf16>, vector<32x128xf32> -> vector<32x128xf32>
    %c2 = arith.constant 2 : index
    %c0_42 = arith.constant 0 : index
    %98 = vector.load %arg4[%c2, %c0_42] : memref<9x512xf32, #tpu.memory_space<vmem>>, vector<1x128xf32>
    %99 = vector.broadcast %98 : vector<1x128xf32> to vector<32x128xf32>
    %100 = arith.addf %97, %99 : vector<32x128xf32>
    %cst_43 = arith.constant 0.000000e+00 : f32
    %101 = vector.broadcast %cst_43 : f32 to vector<32x128xf32>
    %102 = arith.cmpf oge, %100, %101 : vector<32x128xf32>
    %cst_44 = arith.constant 0.00999999977 : f32
    %103 = vector.broadcast %cst_44 : f32 to vector<32x128xf32>
    %104 = arith.mulf %100, %103 : vector<32x128xf32>
    %105 = arith.select %102, %100, %104 : vector<32x128xi1>, vector<32x128xf32>
    %106 = arith.truncf %105 : vector<32x128xf32> to vector<32x128xbf16>
    %c640 = arith.constant 640 : index
    %c0_45 = arith.constant 0 : index
    %107 = vector.load %arg3[%c640, %c0_45] : memref<960x128xbf16, #tpu.memory_space<vmem>>, vector<128x64xbf16>
    %cst_46 = arith.constant dense<0.000000e+00> : vector<32x64xf32>
    %108 = tpu.matmul %106, %107, %cst_46 {dimension_numbers = #tpu.dot_dimension_numbers<[1], [0], [0], [1], [0, 0, 1, 1], [], []>} : vector<32x128xbf16>, vector<128x64xbf16>, vector<32x64xf32> -> vector<32x64xf32>
    %c4 = arith.constant 4 : index
    %c0_47 = arith.constant 0 : index
    %109 = vector.load %arg4[%c4, %c0_47] : memref<9x512xf32, #tpu.memory_space<vmem>>, vector<1x64xf32>
    %110 = vector.broadcast %109 : vector<1x64xf32> to vector<32x64xf32>
    %111 = arith.addf %108, %110 : vector<32x64xf32>
    %cst_48 = arith.constant 0.000000e+00 : f32
    %112 = vector.broadcast %cst_48 : f32 to vector<32x64xf32>
    %113 = arith.cmpf oge, %111, %112 : vector<32x64xf32>
    %cst_49 = arith.constant 0.00999999977 : f32
    %114 = vector.broadcast %cst_49 : f32 to vector<32x64xf32>
    %115 = arith.mulf %111, %114 : vector<32x64xf32>
    %116 = arith.select %113, %111, %115 : vector<32x64xi1>, vector<32x64xf32>
    %117 = arith.truncf %116 : vector<32x64xf32> to vector<32x64xbf16>
    %c832 = arith.constant 832 : index
    %c0_50 = arith.constant 0 : index
    %118 = vector.load %arg3[%c832, %c0_50] : memref<960x128xbf16, #tpu.memory_space<vmem>>, vector<64x32xbf16>
    %cst_51 = arith.constant dense<0.000000e+00> : vector<32x32xf32>
    %119 = tpu.matmul %117, %118, %cst_51 {dimension_numbers = #tpu.dot_dimension_numbers<[1], [0], [0], [1], [0, 0, 1, 1], [], []>} : vector<32x64xbf16>, vector<64x32xbf16>, vector<32x32xf32> -> vector<32x32xf32>
    %c6 = arith.constant 6 : index
    %c0_52 = arith.constant 0 : index
    %120 = vector.load %arg4[%c6, %c0_52] : memref<9x512xf32, #tpu.memory_space<vmem>>, vector<1x32xf32>
    %121 = vector.broadcast %120 : vector<1x32xf32> to vector<32x32xf32>
    %122 = arith.addf %119, %121 : vector<32x32xf32>
    %cst_53 = arith.constant 0.000000e+00 : f32
    %123 = vector.broadcast %cst_53 : f32 to vector<32x32xf32>
    %124 = arith.cmpf oge, %122, %123 : vector<32x32xf32>
    %cst_54 = arith.constant 0.00999999977 : f32
    %125 = vector.broadcast %cst_54 : f32 to vector<32x32xf32>
    %126 = arith.mulf %122, %125 : vector<32x32xf32>
    %127 = arith.select %124, %122, %126 : vector<32x32xi1>, vector<32x32xf32>
    %128 = arith.truncf %127 : vector<32x32xf32> to vector<32x32xbf16>
    %c928 = arith.constant 928 : index
    %c0_55 = arith.constant 0 : index
    %129 = vector.load %arg3[%c928, %c0_55] : memref<960x128xbf16, #tpu.memory_space<vmem>>, vector<32x1xbf16>
    %cst_56 = arith.constant dense<0.000000e+00> : vector<32x1xf32>
    %130 = tpu.matmul %128, %129, %cst_56 {dimension_numbers = #tpu.dot_dimension_numbers<[1], [0], [0], [1], [0, 0, 1, 1], [], []>} : vector<32x32xbf16>, vector<32x1xbf16>, vector<32x1xf32> -> vector<32x1xf32>
    %c8 = arith.constant 8 : index
    %c0_57 = arith.constant 0 : index
    %131 = vector.load %arg4[%c8, %c0_57] : memref<9x512xf32, #tpu.memory_space<vmem>>, vector<1x1xf32>
    %132 = vector.broadcast %131 : vector<1x1xf32> to vector<32x1xf32>
    %133 = arith.addf %130, %132 : vector<32x1xf32>
    %134 = vector.extract_strided_slice %133 {offsets = [0, 0], sizes = [8, 1], strides = [1, 1]} : vector<32x1xf32> to vector<8x1xf32>
    %135 = vector.extract_strided_slice %133 {offsets = [8, 0], sizes = [8, 1], strides = [1, 1]} : vector<32x1xf32> to vector<8x1xf32>
    %136 = vector.extract_strided_slice %133 {offsets = [16, 0], sizes = [8, 1], strides = [1, 1]} : vector<32x1xf32> to vector<8x1xf32>
    %137 = vector.extract_strided_slice %133 {offsets = [24, 0], sizes = [8, 1], strides = [1, 1]} : vector<32x1xf32> to vector<8x1xf32>
    %138 = tpu.concatenate %134, %135, %136, %137 in 1 : vector<8x1xf32>, vector<8x1xf32>, vector<8x1xf32>, vector<8x1xf32> -> vector<8x4xf32>
    %cst_58 = arith.constant dense<0xFF800000> : vector<8xf32>
    %139 = vector.multi_reduction <maximumf>, %138, %cst_58 [1] : vector<8x4xf32> to vector<8xf32>
    %140 = vector.shape_cast %139 : vector<8xf32> to vector<8x1xf32>
    %141 = vector.broadcast %140 : vector<8x1xf32> to vector<8x4xf32>
    %142 = arith.subf %138, %141 : vector<8x4xf32>
    %143 = math.exp %142 : vector<8x4xf32>
    %cst_59 = arith.constant dense<0.000000e+00> : vector<8xf32>
    %144 = vector.multi_reduction <add>, %143, %cst_59 [1] : vector<8x4xf32> to vector<8xf32>
    %145 = vector.shape_cast %144 : vector<8xf32> to vector<8x1xf32>
    %146 = tpu.reciprocal %145 {approx = true} : vector<8x1xf32> -> vector<8x1xf32>
    %147 = vector.broadcast %146 : vector<8x1xf32> to vector<8x4xf32>
    %148 = arith.mulf %143, %147 : vector<8x4xf32>
    %149 = vector.extract_strided_slice %68 {offsets = [0, 0], sizes = [8, 1], strides = [1, 1]} : vector<32x2xf32> to vector<8x1xf32>
    %c0_60 = arith.constant 0 : index
    %c0_61 = arith.constant 0 : index
    %150 = memref.load %arg1[%c0_60, %c0_61] : memref<4x2xf32, #tpu.memory_space<smem>>
    %151 = vector.broadcast %150 : f32 to vector<8x1xf32>
    %152 = arith.addf %149, %151 : vector<8x1xf32>
    %153 = vector.extract_strided_slice %68 {offsets = [8, 0], sizes = [8, 1], strides = [1, 1]} : vector<32x2xf32> to vector<8x1xf32>
    %c1_62 = arith.constant 1 : index
    %c0_63 = arith.constant 0 : index
    %154 = memref.load %arg1[%c1_62, %c0_63] : memref<4x2xf32, #tpu.memory_space<smem>>
    %155 = vector.broadcast %154 : f32 to vector<8x1xf32>
    %156 = arith.addf %153, %155 : vector<8x1xf32>
    %157 = vector.extract_strided_slice %68 {offsets = [16, 0], sizes = [8, 1], strides = [1, 1]} : vector<32x2xf32> to vector<8x1xf32>
    %c2_64 = arith.constant 2 : index
    %c0_65 = arith.constant 0 : index
    %158 = memref.load %arg1[%c2_64, %c0_65] : memref<4x2xf32, #tpu.memory_space<smem>>
    %159 = vector.broadcast %158 : f32 to vector<8x1xf32>
    %160 = arith.addf %157, %159 : vector<8x1xf32>
    %161 = vector.extract_strided_slice %68 {offsets = [24, 0], sizes = [8, 1], strides = [1, 1]} : vector<32x2xf32> to vector<8x1xf32>
    %c3_66 = arith.constant 3 : index
    %c0_67 = arith.constant 0 : index
    %162 = memref.load %arg1[%c3_66, %c0_67] : memref<4x2xf32, #tpu.memory_space<smem>>
    %163 = vector.broadcast %162 : f32 to vector<8x1xf32>
    %164 = arith.addf %161, %163 : vector<8x1xf32>
    %165 = tpu.concatenate %152, %156, %160, %164 in 1 : vector<8x1xf32>, vector<8x1xf32>, vector<8x1xf32>, vector<8x1xf32> -> vector<8x4xf32>
    %166 = vector.extract_strided_slice %68 {offsets = [0, 1], sizes = [8, 1], strides = [1, 1]} : vector<32x2xf32> to vector<8x1xf32>
    %c0_68 = arith.constant 0 : index
    %c1_69 = arith.constant 1 : index
    %167 = memref.load %arg1[%c0_68, %c1_69] : memref<4x2xf32, #tpu.memory_space<smem>>
    %168 = vector.broadcast %167 : f32 to vector<8x1xf32>
    %169 = arith.addf %166, %168 : vector<8x1xf32>
    %170 = vector.extract_strided_slice %68 {offsets = [8, 1], sizes = [8, 1], strides = [1, 1]} : vector<32x2xf32> to vector<8x1xf32>
    %c1_70 = arith.constant 1 : index
    %c1_71 = arith.constant 1 : index
    %171 = memref.load %arg1[%c1_70, %c1_71] : memref<4x2xf32, #tpu.memory_space<smem>>
    %172 = vector.broadcast %171 : f32 to vector<8x1xf32>
    %173 = arith.addf %170, %172 : vector<8x1xf32>
    %174 = vector.extract_strided_slice %68 {offsets = [16, 1], sizes = [8, 1], strides = [1, 1]} : vector<32x2xf32> to vector<8x1xf32>
    %c2_72 = arith.constant 2 : index
    %c1_73 = arith.constant 1 : index
    %175 = memref.load %arg1[%c2_72, %c1_73] : memref<4x2xf32, #tpu.memory_space<smem>>
    %176 = vector.broadcast %175 : f32 to vector<8x1xf32>
    %177 = arith.addf %174, %176 : vector<8x1xf32>
    %178 = vector.extract_strided_slice %68 {offsets = [24, 1], sizes = [8, 1], strides = [1, 1]} : vector<32x2xf32> to vector<8x1xf32>
    %c3_74 = arith.constant 3 : index
    %c1_75 = arith.constant 1 : index
    %179 = memref.load %arg1[%c3_74, %c1_75] : memref<4x2xf32, #tpu.memory_space<smem>>
    %180 = vector.broadcast %179 : f32 to vector<8x1xf32>
    %181 = arith.addf %178, %180 : vector<8x1xf32>
    %182 = tpu.concatenate %169, %173, %177, %181 in 1 : vector<8x1xf32>, vector<8x1xf32>, vector<8x1xf32>, vector<8x1xf32> -> vector<8x4xf32>
    %183 = arith.mulf %148, %165 : vector<8x4xf32>
    %cst_76 = arith.constant dense<0.000000e+00> : vector<8xf32>
    %184 = vector.multi_reduction <add>, %183, %cst_76 [1] : vector<8x4xf32> to vector<8xf32>
    %185 = vector.shape_cast %184 : vector<8xf32> to vector<8x1xf32>
    %186 = arith.mulf %148, %182 : vector<8x4xf32>
    %cst_77 = arith.constant dense<0.000000e+00> : vector<8xf32>
    %187 = vector.multi_reduction <add>, %186, %cst_77 [1] : vector<8x4xf32> to vector<8xf32>
    %188 = vector.shape_cast %187 : vector<8xf32> to vector<8x1xf32>
    %189 = tpu.concatenate %185, %188 in 1 : vector<8x1xf32>, vector<8x1xf32> -> vector<8x2xf32>
    %c0_78 = arith.constant 0 : index
    %c0_79 = arith.constant 0 : index
    %190 = vector.load %arg5[%c0_78, %c0_79] : memref<8x2xf32, #tpu.memory_space<vmem>>, vector<8x2xf32>
    tpu.vector_store %arg5[%c0_78, %c0_79], %189 {strides = array<i32>} : memref<8x2xf32, #tpu.memory_space<vmem>>, vector<8x2xf32>,
    return
  }
}

</mosaic_0001>

<llo_original>
// kernel: sfo_forward.1
$region0: #{sfo_forward.1}
  #allocation0 [shape = 'u32[]', space=smem, size = 0x4, offset = 0x4, fixed_abs, tag = 'smem constant byte address 0x4 - core index']
  #allocation1 [shape = 'u32[144,128]{1,0:T(1,128)}', space=vmem, size = 0x12000, scoped, tag = 'internal scratch']
  %s0 = inlined_call_operand.vmem [shape: f32[12,256], index: 0, kind: input, shape index: {}]
  %s1 = inlined_call_operand.vmem [shape: f32[4,2], index: 1, kind: input, shape index: {}]
  %s2 = inlined_call_operand.hbm [shape: bf16[520,512], index: 2, kind: input, shape index: {}]
  %s3 = inlined_call_operand.hbm [shape: bf16[960,128], index: 3, kind: input, shape index: {}]
  %s4 = inlined_call_operand.vmem [shape: f32[9,512], index: 4, kind: input, shape index: {}]
  %s5 = inlined_call_operand.vmem [shape: f32[8,2], index: 5, kind: output, shape index: {0}]
  %s6 = inlined_call_operand.vmem [shape: f32[8,16], index: 6, kind: output, shape index: {1}]
  %7 = xla_tuple %s5, %s6
  %s8 = sld [smem:[#allocation0]]
  $region50: #{sfo_forward.1} parent=0
    _
  %s10 = ssub.s32 1, %s8
  %s11 = scalar_select 0, %s10, %s8
  $region1: #{sfo_forward.1} parent=0
    #allocation2 [shape = 'u8[2048]{0}', space=smem, size = 0x800, scoped, tag = 'input window, operand 1, single buffered']
    #allocation3 [shape = 's32[1]{0}', space=sflag, size = 0x4, scoped, tag = 'scoped memory for sfo_forward.1']
    #allocation4 [shape = 's32[1]{0}', space=sflag, size = 0x4, scoped, tag = 'scoped memory for sfo_forward.1']
    #allocation5 [shape = 'u8[532480]{0}', space=vmem, size = 0x82000, scoped, tag = 'input window, operand 2, single buffered']
    #allocation6 [shape = 'u8[245760]{0}', space=vmem, size = 0x3c000, scoped, tag = 'input window, operand 3, single buffered']
    #allocation7 [shape = 's32[1]{0}', space=sflag, size = 0x4, scoped, tag = 'scoped memory for sfo_forward.1']
    %12 = vsyncpa [#allocation4], 0
    %13 = vsyncpa [#allocation3], 0
    %14 = vsyncpa [#allocation7], 0
    // Predicated region
    $region2: #{sfo_forward.1} parent=1 // pred_check
      _
    $region3: #{sfo_forward.1} parent=1 // pred_check_branch
      %16 = sbr.rel (0) target = $region5
    $region4: #{sfo_forward.1} parent=1 // pred_region
      _
    $region5: #{sfo_forward.1} parent=1 // pred_fallthru
      _
    // Predicated region
    $region6: #{sfo_forward.1} parent=1 // pred_check
      _
    $region7: #{sfo_forward.1} parent=1 // pred_check_branch
      %18 = sbr.rel (0) target = $region9
    $region8: #{sfo_forward.1} parent=1 // pred_region
      %s20 = ssub.s32 64, 64
      %21 = vsyncadd [#allocation4], %s20
      %s23 = sshll.u32 %s1, 4
      %s24 = int_to_ptr.vmem [resolvable:$true] %s23
      %26 = dma.vmem_to_smem %s24, 64, [#allocation2], [#allocation4]
    $region9: #{sfo_forward.1} parent=1 // pred_fallthru
      _
    // Predicated region
    $region10: #{sfo_forward.1} parent=1 // pred_check
      _
    $region11: #{sfo_forward.1} parent=1 // pred_check_branch
      %28 = sbr.rel (0) target = $region13
    $region12: #{sfo_forward.1} parent=1 // pred_region
      %s30 = ssub.s32 16640, 16640
      %31 = vsyncadd [#allocation3], %s30
      %s32 = sshll.u32 [#allocation5], 4
      %s33 = int_to_ptr.vmem [resolvable:$true] %s32
      %38 = dma.hbm_to_vmem [thread:$0]  %s2, 16640, %s33, [#allocation3], 256, 256, 16
    $region13: #{sfo_forward.1} parent=1 // pred_fallthru
      _
    // Predicated region
    $region14: #{sfo_forward.1} parent=1 // pred_check
      _
    $region15: #{sfo_forward.1} parent=1 // pred_check_branch
      %40 = sbr.rel (0) target = $region17
    $region16: #{sfo_forward.1} parent=1 // pred_region
      %s42 = ssub.s32 7680, 7680
      %43 = vsyncadd [#allocation7], %s42
      %s44 = sshll.u32 [#allocation6], 4
      %s45 = int_to_ptr.vmem [resolvable:$true] %s44
      %50 = dma.hbm_to_vmem [thread:$0]  %s3, 7680, %s45, [#allocation7], 64, 64, 4
    $region17: #{sfo_forward.1} parent=1 // pred_fallthru
      _
    // Predicated region
    $region18: #{sfo_forward.1} parent=1 // pred_check
      _
    $region19: #{sfo_forward.1} parent=1 // pred_check_branch
      %52 = sbr.rel (0) target = $region21
    $region20: #{sfo_forward.1} parent=1 // pred_region
      _
    $region21: #{sfo_forward.1} parent=1 // pred_fallthru
      _
    // Predicated region
    $region22: #{sfo_forward.1} parent=1 // pred_check
      _
    $region23: #{sfo_forward.1} parent=1 // pred_check_branch
      %54 = sbr.rel (0) target = $region25
    $region24: #{sfo_forward.1} parent=1 // pred_region
      %55 = dma.done [#allocation4], 64
    $region25: #{sfo_forward.1} parent=1 // pred_fallthru
      _
    // Predicated region
    $region26: #{sfo_forward.1} parent=1 // pred_check
      _
    $region27: #{sfo_forward.1} parent=1 // pred_check_branch
      %57 = sbr.rel (0) target = $region29
    $region28: #{sfo_forward.1} parent=1 // pred_region
      %58 = dma.done [#allocation3], 16640
    $region29: #{sfo_forward.1} parent=1 // pred_fallthru
      _
    // Predicated region
    $region30: #{sfo_forward.1} parent=1 // pred_check
      _
    $region31: #{sfo_forward.1} parent=1 // pred_check_branch
      %60 = sbr.rel (0) target = $region33
    $region32: #{sfo_forward.1} parent=1 // pred_region
      %61 = dma.done [#allocation7], 7680
    $region33: #{sfo_forward.1} parent=1 // pred_fallthru
      _
    %62 = sfence
    %v64 = vld [vmem:[%s0] sm:$0xff]
    %v65 = vld [vmem:[%s0 + $0x8] sm:$0xff]
    %v66 = vld [vmem:[%s0 + $0x10] sm:$0xf]
    %v67 = vld [vmem:[%s0 + $0x18] sm:$0xf]
    %vm68 = vcmp.ge.f32.partialorder %v64, 0.0
    %vm69 = vcmp.ge.f32.partialorder %v65, 0.0
    %vm70 = vcmp.ge.f32.partialorder %v66, 0.0
    %vm71 = vcmp.ge.f32.partialorder %v67, 0.0
    %v72 = vmul.f32 %v64, 0.01
    %v73 = vmul.f32 %v65, 0.01
    %v74 = vmul.f32 %v66, 0.01
    %v75 = vmul.f32 %v67, 0.01
    %v76 = vsel %vm68, %v64, %v72
    %v77 = vsel %vm69, %v65, %v73
    %v78 = vsel %vm70, %v66, %v74
    %v79 = vsel %vm71, %v67, %v75
    %v80 = vpack.c.bf16 %v78, %v76
    %v81 = vpack.c.bf16 %v79, %v77
    %v82 = vld [vmem:[#allocation5 + $0x200] sm:$0xff]
    %v83 = vld [vmem:[#allocation5 + $0x208] sm:$0xff]
    %v84 = vld [vmem:[#allocation5 + $0x210] sm:$0xff]
    %v85 = vld [vmem:[#allocation5 + $0x218] sm:$0xff]
    %v86 = vld [vmem:[#allocation5 + $0x220] sm:$0xff]
    %v87 = vld [vmem:[#allocation5 + $0x228] sm:$0xff]
    %v88 = vld [vmem:[#allocation5 + $0x230] sm:$0xff]
    %v89 = vld [vmem:[#allocation5 + $0x238] sm:$0xff]
    %v90 = vld [vmem:[#allocation5 + $0x240] sm:$0xff]
    %v91 = vld [vmem:[#allocation5 + $0x248] sm:$0xff]
    %v92 = vld [vmem:[#allocation5 + $0x250] sm:$0xff]
    %v93 = vld [vmem:[#allocation5 + $0x258] sm:$0xff]
    %v94 = vld [vmem:[#allocation5 + $0x260] sm:$0xff]
    %v95 = vld [vmem:[#allocation5 + $0x268] sm:$0xff]
    %v96 = vld [vmem:[#allocation5 + $0x270] sm:$0xff]
    %v97 = vld [vmem:[#allocation5 + $0x278] sm:$0xff]
    %v98 = vld [vmem:[#allocation5 + $0x280] sm:$0xff]
    %v99 = vld [vmem:[#allocation5 + $0x288] sm:$0xff]
    %v100 = vld [vmem:[#allocation5 + $0x290] sm:$0xff]
    %v101 = vld [vmem:[#allocation5 + $0x298] sm:$0xff]
    %v102 = vld [vmem:[#allocation5 + $0x2a0] sm:$0xff]
    %v103 = vld [vmem:[#allocation5 + $0x2a8] sm:$0xff]
    %v104 = vld [vmem:[#allocation5 + $0x2b0] sm:$0xff]
    %v105 = vld [vmem:[#allocation5 + $0x2b8] sm:$0xff]
    %v106 = vld [vmem:[#allocation5 + $0x2c0] sm:$0xff]
    %v107 = vld [vmem:[#allocation5 + $0x2c8] sm:$0xff]
    %v108 = vld [vmem:[#allocation5 + $0x2d0] sm:$0xff]
    %v109 = vld [vmem:[#allocation5 + $0x2d8] sm:$0xff]
    %v110 = vld [vmem:[#allocation5 + $0x2e0] sm:$0xff]
    %v111 = vld [vmem:[#allocation5 + $0x2e8] sm:$0xff]
    %v112 = vld [vmem:[#allocation5 + $0x2f0] sm:$0xff]
    %v113 = vld [vmem:[#allocation5 + $0x2f8] sm:$0xff]
    %v114 = vld [vmem:[#allocation5 + $0x300] sm:$0xff]
    %v115 = vld [vmem:[#allocation5 + $0x308] sm:$0xff]
    %v116 = vld [vmem:[#allocation5 + $0x310] sm:$0xff]
    %v117 = vld [vmem:[#allocation5 + $0x318] sm:$0xff]
    %v118 = vld [vmem:[#allocation5 + $0x320] sm:$0xff]
    %v119 = vld [vmem:[#allocation5 + $0x328] sm:$0xff]
    %v120 = vld [vmem:[#allocation5 + $0x330] sm:$0xff]
    %v121 = vld [vmem:[#allocation5 + $0x338] sm:$0xff]
    %v122 = vld [vmem:[#allocation5 + $0x340] sm:$0xff]
    %v123 = vld [vmem:[#allocation5 + $0x348] sm:$0xff]
    %v124 = vld [vmem:[#allocation5 + $0x350] sm:$0xff]
    %v125 = vld [vmem:[#allocation5 + $0x358] sm:$0xff]
    %v126 = vld [vmem:[#allocation5 + $0x360] sm:$0xff]
    %v127 = vld [vmem:[#allocation5 + $0x368] sm:$0xff]
    %v128 = vld [vmem:[#allocation5 + $0x370] sm:$0xff]
    %v129 = vld [vmem:[#allocation5 + $0x378] sm:$0xff]
    %v130 = vld [vmem:[#allocation5 + $0x380] sm:$0xff]
    %v131 = vld [vmem:[#allocation5 + $0x388] sm:$0xff]
    %v132 = vld [vmem:[#allocation5 + $0x390] sm:$0xff]
    %v133 = vld [vmem:[#allocation5 + $0x398] sm:$0xff]
    %v134 = vld [vmem:[#allocation5 + $0x3a0] sm:$0xff]
    %v135 = vld [vmem:[#allocation5 + $0x3a8] sm:$0xff]
    %v136 = vld [vmem:[#allocation5 + $0x3b0] sm:$0xff]
    %v137 = vld [vmem:[#allocation5 + $0x3b8] sm:$0xff]
    %v138 = vld [vmem:[#allocation5 + $0x3c0] sm:$0xff]
    %v139 = vld [vmem:[#allocation5 + $0x3c8] sm:$0xff]
    %v140 = vld [vmem:[#allocation5 + $0x3d0] sm:$0xff]
    %v141 = vld [vmem:[#allocation5 + $0x3d8] sm:$0xff]
    %v142 = vld [vmem:[#allocation5 + $0x3e0] sm:$0xff]
    %v143 = vld [vmem:[#allocation5 + $0x3e8] sm:$0xff]
    %v144 = vld [vmem:[#allocation5 + $0x3f0] sm:$0xff]
    %v145 = vld [vmem:[#allocation5 + $0x3f8] sm:$0xff]
    %v210 = vunpack.c.l.b16 %v82
    %v211 = vunpack.c.h.b16 %v82
    %v212 = vunpack.c.l.b16 %v83
    %v213 = vunpack.c.h.b16 %v83
    %v214 = vunpack.c.l.b16 %v84
    %v215 = vunpack.c.h.b16 %v84
    %v216 = vunpack.c.l.b16 %v85
    %v217 = vunpack.c.h.b16 %v85
    %v218 = vunpack.c.l.b16 %v86
    %v219 = vunpack.c.h.b16 %v86
    %v220 = vunpack.c.l.b16 %v87
    %v221 = vunpack.c.h.b16 %v87
    %v222 = vunpack.c.l.b16 %v88
    %v223 = vunpack.c.h.b16 %v88
    %v224 = vunpack.c.l.b16 %v89
    %v225 = vunpack.c.h.b16 %v89
    %v226 = vunpack.c.l.b16 %v90
    %v227 = vunpack.c.h.b16 %v90
    %v228 = vunpack.c.l.b16 %v91
    %v229 = vunpack.c.h.b16 %v91
    %v230 = vunpack.c.l.b16 %v92
    %v231 = vunpack.c.h.b16 %v92
    %v232 = vunpack.c.l.b16 %v93
    %v233 = vunpack.c.h.b16 %v93
    %v234 = vunpack.c.l.b16 %v94
    %v235 = vunpack.c.h.b16 %v94
    %v236 = vunpack.c.l.b16 %v95
    %v237 = vunpack.c.h.b16 %v95
    %v238 = vunpack.c.l.b16 %v96
    %v239 = vunpack.c.h.b16 %v96
    %v240 = vunpack.c.l.b16 %v97
    %v241 = vunpack.c.h.b16 %v97
    %v242 = vunpack.c.l.b16 %v98
    %v243 = vunpack.c.h.b16 %v98
    %v244 = vunpack.c.l.b16 %v99
    %v245 = vunpack.c.h.b16 %v99
    %v246 = vunpack.c.l.b16 %v100
    %v247 = vunpack.c.h.b16 %v100
    %v248 = vunpack.c.l.b16 %v101
    %v249 = vunpack.c.h.b16 %v101
    %v250 = vunpack.c.l.b16 %v102
    %v251 = vunpack.c.h.b16 %v102
    %v252 = vunpack.c.l.b16 %v103
    %v253 = vunpack.c.h.b16 %v103
    %v254 = vunpack.c.l.b16 %v104
    %v255 = vunpack.c.h.b16 %v104
    %v256 = vunpack.c.l.b16 %v105
    %v257 = vunpack.c.h.b16 %v105
    %v258 = vunpack.c.l.b16 %v106
    %v259 = vunpack.c.h.b16 %v106
    %v260 = vunpack.c.l.b16 %v107
    %v261 = vunpack.c.h.b16 %v107
    %v262 = vunpack.c.l.b16 %v108
    %v263 = vunpack.c.h.b16 %v108
    %v264 = vunpack.c.l.b16 %v109
    %v265 = vunpack.c.h.b16 %v109
    %v266 = vunpack.c.l.b16 %v110
    %v267 = vunpack.c.h.b16 %v110
    %v268 = vunpack.c.l.b16 %v111
    %v269 = vunpack.c.h.b16 %v111
    %v270 = vunpack.c.l.b16 %v112
    %v271 = vunpack.c.h.b16 %v112
    %v272 = vunpack.c.l.b16 %v113
    %v273 = vunpack.c.h.b16 %v113
    %v274 = vunpack.c.l.b16 %v114
    %v275 = vunpack.c.h.b16 %v114
    %v276 = vunpack.c.l.b16 %v115
    %v277 = vunpack.c.h.b16 %v115
    %v278 = vunpack.c.l.b16 %v116
    %v279 = vunpack.c.h.b16 %v116
    %v280 = vunpack.c.l.b16 %v117
    %v281 = vunpack.c.h.b16 %v117
    %v282 = vunpack.c.l.b16 %v118
    %v283 = vunpack.c.h.b16 %v118
    %v284 = vunpack.c.l.b16 %v119
    %v285 = vunpack.c.h.b16 %v119
    %v286 = vunpack.c.l.b16 %v120
    %v287 = vunpack.c.h.b16 %v120
    %v288 = vunpack.c.l.b16 %v121
    %v289 = vunpack.c.h.b16 %v121
    %v290 = vunpack.c.l.b16 %v122
    %v291 = vunpack.c.h.b16 %v122
    %v292 = vunpack.c.l.b16 %v123
    %v293 = vunpack.c.h.b16 %v123
    %v294 = vunpack.c.l.b16 %v124
    %v295 = vunpack.c.h.b16 %v124
    %v296 = vunpack.c.l.b16 %v125
    %v297 = vunpack.c.h.b16 %v125
    %v298 = vunpack.c.l.b16 %v126
    %v299 = vunpack.c.h.b16 %v126
    %v300 = vunpack.c.l.b16 %v127
    %v301 = vunpack.c.h.b16 %v127
    %v302 = vunpack.c.l.b16 %v128
    %v303 = vunpack.c.h.b16 %v128
    %v304 = vunpack.c.l.b16 %v129
    %v305 = vunpack.c.h.b16 %v129
    %v306 = vunpack.c.l.b16 %v130
    %v307 = vunpack.c.h.b16 %v130
    %v308 = vunpack.c.l.b16 %v131
    %v309 = vunpack.c.h.b16 %v131
    %v310 = vunpack.c.l.b16 %v132
    %v311 = vunpack.c.h.b16 %v132
    %v312 = vunpack.c.l.b16 %v133
    %v313 = vunpack.c.h.b16 %v133
    %v314 = vunpack.c.l.b16 %v134
    %v315 = vunpack.c.h.b16 %v134
    %v316 = vunpack.c.l.b16 %v135
    %v317 = vunpack.c.h.b16 %v135
    %v318 = vunpack.c.l.b16 %v136
    %v319 = vunpack.c.h.b16 %v136
    %v320 = vunpack.c.l.b16 %v137
    %v321 = vunpack.c.h.b16 %v137
    %v322 = vunpack.c.l.b16 %v138
    %v323 = vunpack.c.h.b16 %v138
    %v324 = vunpack.c.l.b16 %v139
    %v325 = vunpack.c.h.b16 %v139
    %v326 = vunpack.c.l.b16 %v140
    %v327 = vunpack.c.h.b16 %v140
    %v328 = vunpack.c.l.b16 %v141
    %v329 = vunpack.c.h.b16 %v141
    %v330 = vunpack.c.l.b16 %v142
    %v331 = vunpack.c.h.b16 %v142
    %v332 = vunpack.c.l.b16 %v143
    %v333 = vunpack.c.h.b16 %v143
    %v334 = vunpack.c.l.b16 %v144
    %v335 = vunpack.c.h.b16 %v144
    %v336 = vunpack.c.l.b16 %v145
    %v337 = vunpack.c.h.b16 %v145
    %v338 = vpack.c.b16 %v214, %v210
    %v339 = vpack.c.b16 %v215, %v211
    %v340 = vpack.c.b16 %v216, %v212
    %v341 = vpack.c.b16 %v217, %v213
    %v342 = vpack.c.b16 %v222, %v218
    %v343 = vpack.c.b16 %v223, %v219
    %v344 = vpack.c.b16 %v224, %v220
    %v345 = vpack.c.b16 %v225, %v221
    %v346 = vpack.c.b16 %v230, %v226
    %v347 = vpack.c.b16 %v231, %v227
    %v348 = vpack.c.b16 %v232, %v228
    %v349 = vpack.c.b16 %v233, %v229
    %v350 = vpack.c.b16 %v238, %v234
    %v351 = vpack.c.b16 %v239, %v235
    %v352 = vpack.c.b16 %v240, %v236
    %v353 = vpack.c.b16 %v241, %v237
    %v354 = vpack.c.b16 %v246, %v242
    %v355 = vpack.c.b16 %v247, %v243
    %v356 = vpack.c.b16 %v248, %v244
    %v357 = vpack.c.b16 %v249, %v245
    %v358 = vpack.c.b16 %v254, %v250
    %v359 = vpack.c.b16 %v255, %v251
    %v360 = vpack.c.b16 %v256, %v252
    %v361 = vpack.c.b16 %v257, %v253
    %v362 = vpack.c.b16 %v262, %v258
    %v363 = vpack.c.b16 %v263, %v259
    %v364 = vpack.c.b16 %v264, %v260
    %v365 = vpack.c.b16 %v265, %v261
    %v366 = vpack.c.b16 %v270, %v266
    %v367 = vpack.c.b16 %v271, %v267
    %v368 = vpack.c.b16 %v272, %v268
    %v369 = vpack.c.b16 %v273, %v269
    %v370 = vpack.c.b16 %v278, %v274
    %v371 = vpack.c.b16 %v279, %v275
    %v372 = vpack.c.b16 %v280, %v276
    %v373 = vpack.c.b16 %v281, %v277
    %v374 = vpack.c.b16 %v286, %v282
    %v375 = vpack.c.b16 %v287, %v283
    %v376 = vpack.c.b16 %v288, %v284
    %v377 = vpack.c.b16 %v289, %v285
    %v378 = vpack.c.b16 %v294, %v290
    %v379 = vpack.c.b16 %v295, %v291
    %v380 = vpack.c.b16 %v296, %v292
    %v381 = vpack.c.b16 %v297, %v293
    %v382 = vpack.c.b16 %v302, %v298
    %v383 = vpack.c.b16 %v303, %v299
    %v384 = vpack.c.b16 %v304, %v300
    %v385 = vpack.c.b16 %v305, %v301
    %v386 = vpack.c.b16 %v310, %v306
    %v387 = vpack.c.b16 %v311, %v307
    %v388 = vpack.c.b16 %v312, %v308
    %v389 = vpack.c.b16 %v313, %v309
    %v390 = vpack.c.b16 %v318, %v314
    %v391 = vpack.c.b16 %v319, %v315
    %v392 = vpack.c.b16 %v320, %v316
    %v393 = vpack.c.b16 %v321, %v317
    %v394 = vpack.c.b16 %v326, %v322
    %v395 = vpack.c.b16 %v327, %v323
    %v396 = vpack.c.b16 %v328, %v324
    %v397 = vpack.c.b16 %v329, %v325
    %v398 = vpack.c.b16 %v334, %v330
    %v399 = vpack.c.b16 %v335, %v331
    %v400 = vpack.c.b16 %v336, %v332
    %v401 = vpack.c.b16 %v337, %v333
    %466 = vmatprep.subr.bf16.mxu0 %v367
    %467 = vmatpush1.bf16.msra.mxu0 %v366
    %468 = vmatprep.subr.bf16.mxu0 %v363
    %469 = vmatpush1.bf16.msra.mxu0 %v362
    %470 = vmatprep.subr.bf16.mxu0 %v359
    %471 = vmatpush1.bf16.msra.mxu0 %v358
    %472 = vmatprep.subr.bf16.mxu0 %v355
    %473 = vmatpush1.bf16.msra.mxu0 %v354
    %474 = vmatprep.subr.bf16.mxu0 %v351
    %475 = vmatpush1.bf16.msra.mxu0 %v350
    %476 = vmatprep.subr.bf16.mxu0 %v347
    %477 = vmatpush1.bf16.msra.mxu0 %v346
    %478 = vmatprep.subr.bf16.mxu0 %v343
    %479 = vmatpush1.bf16.msra.mxu0 %v342
    %480 = vmatprep.subr.bf16.mxu0 %v339
    %481 = vmatpush1.bf16.msra.mxu0 %v338
    %482 = vmatprep.subr.bf16.mxu0 %v399
    %483 = vmatpush2.bf16.msra.mxu0 %v398
    %484 = vmatprep.subr.bf16.mxu0 %v395
    %485 = vmatpush2.bf16.msra.mxu0 %v394
    %486 = vmatprep.subr.bf16.mxu0 %v391
    %487 = vmatpush2.bf16.msra.mxu0 %v390
    %488 = vmatprep.subr.bf16.mxu0 %v387
    %489 = vmatpush2.bf16.msra.mxu0 %v386
    %490 = vmatprep.subr.bf16.mxu0 %v383
    %491 = vmatpush2.bf16.msra.mxu0 %v382
    %492 = vmatprep.subr.bf16.mxu0 %v379
    %493 = vmatpush2.bf16.msra.mxu0 %v378
    %494 = vmatprep.subr.bf16.mxu0 %v375
    %495 = vmatpush2.bf16.msra.mxu0 %v374
    %496 = vmatprep.subr.bf16.mxu0 %v371
    %497 = vmatpush2.bf16.msra.mxu0 %v370
    %498 = vmatprep.mubr.bf16.mxu0 %v81
    %499 = vmatmul.mubr.bf16.gmra.mxu0 %v80
    %v500 = vpop.f32.mrf.mxu0
    %v501 = vadd.f32 0.0, %v500
    %v502 = vpop.f32.mrf.mxu0
    %v503 = vadd.f32 0.0, %v502
    %v504 = vpop.f32.mrf.mxu0
    %v505 = vpop.f32.mrf.mxu0
    %506 = vdwg.mxu0
    %507 = vmatprep.subr.bf16.mxu0 %v369
    %508 = vmatpush1.bf16.msra.mxu0 %v368
    %509 = vmatprep.subr.bf16.mxu0 %v365
    %510 = vmatpush1.bf16.msra.mxu0 %v364
    %511 = vmatprep.subr.bf16.mxu0 %v361
    %512 = vmatpush1.bf16.msra.mxu0 %v360
    %513 = vmatprep.subr.bf16.mxu0 %v357
    %514 = vmatpush1.bf16.msra.mxu0 %v356
    %515 = vmatprep.subr.bf16.mxu0 %v353
    %516 = vmatpush1.bf16.msra.mxu0 %v352
    %517 = vmatprep.subr.bf16.mxu0 %v349
    %518 = vmatpush1.bf16.msra.mxu0 %v348
    %519 = vmatprep.subr.bf16.mxu0 %v345
    %520 = vmatpush1.bf16.msra.mxu0 %v344
    %521 = vmatprep.subr.bf16.mxu0 %v341
    %522 = vmatpush1.bf16.msra.mxu0 %v340
    %523 = vmatprep.subr.bf16.mxu0 %v401
    %524 = vmatpush2.bf16.msra.mxu0 %v400
    %525 = vmatprep.subr.bf16.mxu0 %v397
    %526 = vmatpush2.bf16.msra.mxu0 %v396
    %527 = vmatprep.subr.bf16.mxu0 %v393
    %528 = vmatpush2.bf16.msra.mxu0 %v392
    %529 = vmatprep.subr.bf16.mxu0 %v389
    %530 = vmatpush2.bf16.msra.mxu0 %v388
    %531 = vmatprep.subr.bf16.mxu0 %v385
    %532 = vmatpush2.bf16.msra.mxu0 %v384
    %533 = vmatprep.subr.bf16.mxu0 %v381
    %534 = vmatpush2.bf16.msra.mxu0 %v380
    %535 = vmatprep.subr.bf16.mxu0 %v377
    %536 = vmatpush2.bf16.msra.mxu0 %v376
    %537 = vmatprep.subr.bf16.mxu0 %v373
    %538 = vmatpush2.bf16.msra.mxu0 %v372
    %539 = vmatprep.mubr.bf16.mxu0 %v81
    %540 = vmatmul.mubr.bf16.gmra.mxu0 %v80
    %v541 = vpop.f32.mrf.mxu0
    %v542 = vadd.f32 0.0, %v541
    %v543 = vpop.f32.mrf.mxu0
    %v544 = vadd.f32 0.0, %v543
    %v545 = vpop.f32.mrf.mxu0
    %v546 = vpop.f32.mrf.mxu0
    %547 = vdwg.mxu0
    %v548 = vld [vmem:[#allocation5] sm:$0xff]
    %v549 = vld [vmem:[#allocation5 + $0x8] sm:$0xff]
    %v550 = vld [vmem:[#allocation5 + $0x10] sm:$0xff]
    %v551 = vld [vmem:[#allocation5 + $0x18] sm:$0xff]
    %v552 = vld [vmem:[#allocation5 + $0x20] sm:$0xff]
    %v553 = vld [vmem:[#allocation5 + $0x28] sm:$0xff]
    %v554 = vld [vmem:[#allocation5 + $0x30] sm:$0xff]
    %v555 = vld [vmem:[#allocation5 + $0x38] sm:$0xff]
    %v556 = vld [vmem:[#allocation5 + $0x40] sm:$0xff]
    %v557 = vld [vmem:[#allocation5 + $0x48] sm:$0xff]
    %v558 = vld [vmem:[#allocation5 + $0x50] sm:$0xff]
    %v559 = vld [vmem:[#allocation5 + $0x58] sm:$0xff]
    %v560 = vld [vmem:[#allocation5 + $0x60] sm:$0xff]
    %v561 = vld [vmem:[#allocation5 + $0x68] sm:$0xff]
    %v562 = vld [vmem:[#allocation5 + $0x70] sm:$0xff]
    %v563 = vld [vmem:[#allocation5 + $0x78] sm:$0xff]
    %v564 = vld [vmem:[#allocation5 + $0x80] sm:$0xff]
    %v565 = vld [vmem:[#allocation5 + $0x88] sm:$0xff]
    %v566 = vld [vmem:[#allocation5 + $0x90] sm:$0xff]
    %v567 = vld [vmem:[#allocation5 + $0x98] sm:$0xff]
    %v568 = vld [vmem:[#allocation5 + $0xa0] sm:$0xff]
    %v569 = vld [vmem:[#allocation5 + $0xa8] sm:$0xff]
    %v570 = vld [vmem:[#allocation5 + $0xb0] sm:$0xff]
    %v571 = vld [vmem:[#allocation5 + $0xb8] sm:$0xff]
    %v572 = vld [vmem:[#allocation5 + $0xc0] sm:$0xff]
    %v573 = vld [vmem:[#allocation5 + $0xc8] sm:$0xff]
    %v574 = vld [vmem:[#allocation5 + $0xd0] sm:$0xff]
    %v575 = vld [vmem:[#allocation5 + $0xd8] sm:$0xff]
    %v576 = vld [vmem:[#allocation5 + $0xe0] sm:$0xff]
    %v577 = vld [vmem:[#allocation5 + $0xe8] sm:$0xff]
    %v578 = vld [vmem:[#allocation5 + $0xf0] sm:$0xff]
    %v579 = vld [vmem:[#allocation5 + $0xf8] sm:$0xff]
    %v580 = vld [vmem:[#allocation5 + $0x100] sm:$0xff]
    %v581 = vld [vmem:[#allocation5 + $0x108] sm:$0xff]
    %v582 = vld [vmem:[#allocation5 + $0x110] sm:$0xff]
    %v583 = vld [vmem:[#allocation5 + $0x118] sm:$0xff]
    %v584 = vld [vmem:[#allocation5 + $0x120] sm:$0xff]
    %v585 = vld [vmem:[#allocation5 + $0x128] sm:$0xff]
    %v586 = vld [vmem:[#allocation5 + $0x130] sm:$0xff]
    %v587 = vld [vmem:[#allocation5 + $0x138] sm:$0xff]
    %v588 = vld [vmem:[#allocation5 + $0x140] sm:$0xff]
    %v589 = vld [vmem:[#allocation5 + $0x148] sm:$0xff]
    %v590 = vld [vmem:[#allocation5 + $0x150] sm:$0xff]
    %v591 = vld [vmem:[#allocation5 + $0x158] sm:$0xff]
    %v592 = vld [vmem:[#allocation5 + $0x160] sm:$0xff]
    %v593 = vld [vmem:[#allocation5 + $0x168] sm:$0xff]
    %v594 = vld [vmem:[#allocation5 + $0x170] sm:$0xff]
    %v595 = vld [vmem:[#allocation5 + $0x178] sm:$0xff]
    %v596 = vld [vmem:[#allocation5 + $0x180] sm:$0xff]
    %v597 = vld [vmem:[#allocation5 + $0x188] sm:$0xff]
    %v598 = vld [vmem:[#allocation5 + $0x190] sm:$0xff]
    %v599 = vld [vmem:[#allocation5 + $0x198] sm:$0xff]
    %v600 = vld [vmem:[#allocation5 + $0x1a0] sm:$0xff]
    %v601 = vld [vmem:[#allocation5 + $0x1a8] sm:$0xff]
    %v602 = vld [vmem:[#allocation5 + $0x1b0] sm:$0xff]
    %v603 = vld [vmem:[#allocation5 + $0x1b8] sm:$0xff]
    %v604 = vld [vmem:[#allocation5 + $0x1c0] sm:$0xff]
    %v605 = vld [vmem:[#allocation5 + $0x1c8] sm:$0xff]
    %v606 = vld [vmem:[#allocation5 + $0x1d0] sm:$0xff]
    %v607 = vld [vmem:[#allocation5 + $0x1d8] sm:$0xff]
    %v608 = vld [vmem:[#allocation5 + $0x1e0] sm:$0xff]
    %v609 = vld [vmem:[#allocation5 + $0x1e8] sm:$0xff]
    %v610 = vld [vmem:[#allocation5 + $0x1f0] sm:$0xff]
    %v611 = vld [vmem:[#allocation5 + $0x1f8] sm:$0xff]
    %v614 = vrot.slane %v80, 4
    %v615 = vrot.slane %v81, 4
    %v682 = vunpack.c.l.b16 %v548
    %v683 = vunpack.c.h.b16 %v548
    %v684 = vunpack.c.l.b16 %v549
    %v685 = vunpack.c.h.b16 %v549
    %v686 = vunpack.c.l.b16 %v550
    %v687 = vunpack.c.h.b16 %v550
    %v688 = vunpack.c.l.b16 %v551
    %v689 = vunpack.c.h.b16 %v551
    %v690 = vunpack.c.l.b16 %v552
    %v691 = vunpack.c.h.b16 %v552
    %v692 = vunpack.c.l.b16 %v553
    %v693 = vunpack.c.h.b16 %v553
    %v694 = vunpack.c.l.b16 %v554
    %v695 = vunpack.c.h.b16 %v554
    %v696 = vunpack.c.l.b16 %v555
    %v697 = vunpack.c.h.b16 %v555
    %v698 = vunpack.c.l.b16 %v556
    %v699 = vunpack.c.h.b16 %v556
    %v700 = vunpack.c.l.b16 %v557
    %v701 = vunpack.c.h.b16 %v557
    %v702 = vunpack.c.l.b16 %v558
    %v703 = vunpack.c.h.b16 %v558
    %v704 = vunpack.c.l.b16 %v559
    %v705 = vunpack.c.h.b16 %v559
    %v706 = vunpack.c.l.b16 %v560
    %v707 = vunpack.c.h.b16 %v560
    %v708 = vunpack.c.l.b16 %v561
    %v709 = vunpack.c.h.b16 %v561
    %v710 = vunpack.c.l.b16 %v562
    %v711 = vunpack.c.h.b16 %v562
    %v712 = vunpack.c.l.b16 %v563
    %v713 = vunpack.c.h.b16 %v563
    %v714 = vunpack.c.l.b16 %v564
    %v715 = vunpack.c.h.b16 %v564
    %v716 = vunpack.c.l.b16 %v565
    %v717 = vunpack.c.h.b16 %v565
    %v718 = vunpack.c.l.b16 %v566
    %v719 = vunpack.c.h.b16 %v566
    %v720 = vunpack.c.l.b16 %v567
    %v721 = vunpack.c.h.b16 %v567
    %v722 = vunpack.c.l.b16 %v568
    %v723 = vunpack.c.h.b16 %v568
    %v724 = vunpack.c.l.b16 %v569
    %v725 = vunpack.c.h.b16 %v569
    %v726 = vunpack.c.l.b16 %v570
    %v727 = vunpack.c.h.b16 %v570
    %v728 = vunpack.c.l.b16 %v571
    %v729 = vunpack.c.h.b16 %v571
    %v730 = vunpack.c.l.b16 %v572
    %v731 = vunpack.c.h.b16 %v572
    %v732 = vunpack.c.l.b16 %v573
    %v733 = vunpack.c.h.b16 %v573
    %v734 = vunpack.c.l.b16 %v574
    %v735 = vunpack.c.h.b16 %v574
    %v736 = vunpack.c.l.b16 %v575
    %v737 = vunpack.c.h.b16 %v575
    %v738 = vunpack.c.l.b16 %v576
    %v739 = vunpack.c.h.b16 %v576
    %v740 = vunpack.c.l.b16 %v577
    %v741 = vunpack.c.h.b16 %v577
    %v742 = vunpack.c.l.b16 %v578
    %v743 = vunpack.c.h.b16 %v578
    %v744 = vunpack.c.l.b16 %v579
    %v745 = vunpack.c.h.b16 %v579
    %v746 = vunpack.c.l.b16 %v580
    %v747 = vunpack.c.h.b16 %v580
    %v748 = vunpack.c.l.b16 %v581
    %v749 = vunpack.c.h.b16 %v581
    %v750 = vunpack.c.l.b16 %v582
    %v751 = vunpack.c.h.b16 %v582
    %v752 = vunpack.c.l.b16 %v583
    %v753 = vunpack.c.h.b16 %v583
    %v754 = vunpack.c.l.b16 %v584
    %v755 = vunpack.c.h.b16 %v584
    %v756 = vunpack.c.l.b16 %v585
    %v757 = vunpack.c.h.b16 %v585
    %v758 = vunpack.c.l.b16 %v586
    %v759 = vunpack.c.h.b16 %v586
    %v760 = vunpack.c.l.b16 %v587
    %v761 = vunpack.c.h.b16 %v587
    %v762 = vunpack.c.l.b16 %v588
    %v763 = vunpack.c.h.b16 %v588
    %v764 = vunpack.c.l.b16 %v589
    %v765 = vunpack.c.h.b16 %v589
    %v766 = vunpack.c.l.b16 %v590
    %v767 = vunpack.c.h.b16 %v590
    %v768 = vunpack.c.l.b16 %v591
    %v769 = vunpack.c.h.b16 %v591
    %v770 = vunpack.c.l.b16 %v592
    %v771 = vunpack.c.h.b16 %v592
    %v772 = vunpack.c.l.b16 %v593
    %v773 = vunpack.c.h.b16 %v593
    %v774 = vunpack.c.l.b16 %v594
    %v775 = vunpack.c.h.b16 %v594
    %v776 = vunpack.c.l.b16 %v595
    %v777 = vunpack.c.h.b16 %v595
    %v778 = vunpack.c.l.b16 %v596
    %v779 = vunpack.c.h.b16 %v596
    %v780 = vunpack.c.l.b16 %v597
    %v781 = vunpack.c.h.b16 %v597
    %v782 = vunpack.c.l.b16 %v598
    %v783 = vunpack.c.h.b16 %v598
    %v784 = vunpack.c.l.b16 %v599
    %v785 = vunpack.c.h.b16 %v599
    %v786 = vunpack.c.l.b16 %v600
    %v787 = vunpack.c.h.b16 %v600
    %v788 = vunpack.c.l.b16 %v601
    %v789 = vunpack.c.h.b16 %v601
    %v790 = vunpack.c.l.b16 %v602
    %v791 = vunpack.c.h.b16 %v602
    %v792 = vunpack.c.l.b16 %v603
    %v793 = vunpack.c.h.b16 %v603
    %v794 = vunpack.c.l.b16 %v604
    %v795 = vunpack.c.h.b16 %v604
    %v796 = vunpack.c.l.b16 %v605
    %v797 = vunpack.c.h.b16 %v605
    %v798 = vunpack.c.l.b16 %v606
    %v799 = vunpack.c.h.b16 %v606
    %v800 = vunpack.c.l.b16 %v607
    %v801 = vunpack.c.h.b16 %v607
    %v802 = vunpack.c.l.b16 %v608
    %v803 = vunpack.c.h.b16 %v608
    %v804 = vunpack.c.l.b16 %v609
    %v805 = vunpack.c.h.b16 %v609
    %v806 = vunpack.c.l.b16 %v610
    %v807 = vunpack.c.h.b16 %v610
    %v808 = vunpack.c.l.b16 %v611
    %v809 = vunpack.c.h.b16 %v611
    %v810 = vpack.c.b16 %v686, %v682
    %v811 = vpack.c.b16 %v687, %v683
    %v812 = vpack.c.b16 %v688, %v684
    %v813 = vpack.c.b16 %v689, %v685
    %v814 = vpack.c.b16 %v694, %v690
    %v815 = vpack.c.b16 %v695, %v691
    %v816 = vpack.c.b16 %v696, %v692
    %v817 = vpack.c.b16 %v697, %v693
    %v818 = vpack.c.b16 %v702, %v698
    %v819 = vpack.c.b16 %v703, %v699
    %v820 = vpack.c.b16 %v704, %v700
    %v821 = vpack.c.b16 %v705, %v701
    %v822 = vpack.c.b16 %v710, %v706
    %v823 = vpack.c.b16 %v711, %v707
    %v824 = vpack.c.b16 %v712, %v708
    %v825 = vpack.c.b16 %v713, %v709
    %v826 = vpack.c.b16 %v718, %v714
    %v827 = vpack.c.b16 %v719, %v715
    %v828 = vpack.c.b16 %v720, %v716
    %v829 = vpack.c.b16 %v721, %v717
    %v830 = vpack.c.b16 %v726, %v722
    %v831 = vpack.c.b16 %v727, %v723
    %v832 = vpack.c.b16 %v728, %v724
    %v833 = vpack.c.b16 %v729, %v725
    %v834 = vpack.c.b16 %v734, %v730
    %v835 = vpack.c.b16 %v735, %v731
    %v836 = vpack.c.b16 %v736, %v732
    %v837 = vpack.c.b16 %v737, %v733
    %v838 = vpack.c.b16 %v742, %v738
    %v839 = vpack.c.b16 %v743, %v739
    %v840 = vpack.c.b16 %v744, %v740
    %v841 = vpack.c.b16 %v745, %v741
    %v842 = vpack.c.b16 %v750, %v746
    %v843 = vpack.c.b16 %v751, %v747
    %v844 = vpack.c.b16 %v752, %v748
    %v845 = vpack.c.b16 %v753, %v749
    %v846 = vpack.c.b16 %v758, %v754
    %v847 = vpack.c.b16 %v759, %v755
    %v848 = vpack.c.b16 %v760, %v756
    %v849 = vpack.c.b16 %v761, %v757
    %v850 = vpack.c.b16 %v766, %v762
    %v851 = vpack.c.b16 %v767, %v763
    %v852 = vpack.c.b16 %v768, %v764
    %v853 = vpack.c.b16 %v769, %v765
    %v854 = vpack.c.b16 %v774, %v770
    %v855 = vpack.c.b16 %v775, %v771
    %v856 = vpack.c.b16 %v776, %v772
    %v857 = vpack.c.b16 %v777, %v773
    %v858 = vpack.c.b16 %v782, %v778
    %v859 = vpack.c.b16 %v783, %v779
    %v860 = vpack.c.b16 %v784, %v780
    %v861 = vpack.c.b16 %v785, %v781
    %v862 = vpack.c.b16 %v790, %v786
    %v863 = vpack.c.b16 %v791, %v787
    %v864 = vpack.c.b16 %v792, %v788
    %v865 = vpack.c.b16 %v793, %v789
    %v866 = vpack.c.b16 %v798, %v794
    %v867 = vpack.c.b16 %v799, %v795
    %v868 = vpack.c.b16 %v800, %v796
    %v869 = vpack.c.b16 %v801, %v797
    %v870 = vpack.c.b16 %v806, %v802
    %v871 = vpack.c.b16 %v807, %v803
    %v872 = vpack.c.b16 %v808, %v804
    %v873 = vpack.c.b16 %v809, %v805
    %938 = vmatprep.subr.bf16.mxu0 %v839
    %939 = vmatpush1.bf16.msra.mxu0 %v838
    %940 = vmatprep.subr.bf16.mxu0 %v835
    %941 = vmatpush1.bf16.msra.mxu0 %v834
    %942 = vmatprep.subr.bf16.mxu0 %v831
    %943 = vmatpush1.bf16.msra.mxu0 %v830
    %944 = vmatprep.subr.bf16.mxu0 %v827
    %945 = vmatpush1.bf16.msra.mxu0 %v826
    %946 = vmatprep.subr.bf16.mxu0 %v823
    %947 = vmatpush1.bf16.msra.mxu0 %v822
    %948 = vmatprep.subr.bf16.mxu0 %v819
    %949 = vmatpush1.bf16.msra.mxu0 %v818
    %950 = vmatprep.subr.bf16.mxu0 %v815
    %951 = vmatpush1.bf16.msra.mxu0 %v814
    %952 = vmatprep.subr.bf16.mxu0 %v811
    %953 = vmatpush1.bf16.msra.mxu0 %v810
    %954 = vmatprep.subr.bf16.mxu0 %v871
    %955 = vmatpush2.bf16.msra.mxu0 %v870
    %956 = vmatprep.subr.bf16.mxu0 %v867
    %957 = vmatpush2.bf16.msra.mxu0 %v866
    %958 = vmatprep.subr.bf16.mxu0 %v863
    %959 = vmatpush2.bf16.msra.mxu0 %v862
    %960 = vmatprep.subr.bf16.mxu0 %v859
    %961 = vmatpush2.bf16.msra.mxu0 %v858
    %962 = vmatprep.subr.bf16.mxu0 %v855
    %963 = vmatpush2.bf16.msra.mxu0 %v854
    %964 = vmatprep.subr.bf16.mxu0 %v851
    %965 = vmatpush2.bf16.msra.mxu0 %v850
    %966 = vmatprep.subr.bf16.mxu0 %v847
    %967 = vmatpush2.bf16.msra.mxu0 %v846
    %968 = vmatprep.subr.bf16.mxu0 %v843
    %969 = vmatpush2.bf16.msra.mxu0 %v842
    %970 = vmatprep.mubr.bf16.mxu0 %v615
    %971 = vmatmul.mubr.bf16.gmra.mxu0 %v614
    %v972 = vpop.f32.mrf.mxu0
    %v973 = vadd.f32 0.0, %v972
    %v974 = vpop.f32.mrf.mxu0
    %v975 = vadd.f32 0.0, %v974
    %v976 = vpop.f32.mrf.mxu0
    %v977 = vpop.f32.mrf.mxu0
    %978 = vdwg.mxu0
    %979 = vmatprep.subr.bf16.mxu0 %v841
    %980 = vmatpush1.bf16.msra.mxu0 %v840
    %981 = vmatprep.subr.bf16.mxu0 %v837
    %982 = vmatpush1.bf16.msra.mxu0 %v836
    %983 = vmatprep.subr.bf16.mxu0 %v833
    %984 = vmatpush1.bf16.msra.mxu0 %v832
    %985 = vmatprep.subr.bf16.mxu0 %v829
    %986 = vmatpush1.bf16.msra.mxu0 %v828
    %987 = vmatprep.subr.bf16.mxu0 %v825
    %988 = vmatpush1.bf16.msra.mxu0 %v824
    %989 = vmatprep.subr.bf16.mxu0 %v821
    %990 = vmatpush1.bf16.msra.mxu0 %v820
    %991 = vmatprep.subr.bf16.mxu0 %v817
    %992 = vmatpush1.bf16.msra.mxu0 %v816
    %993 = vmatprep.subr.bf16.mxu0 %v813
    %994 = vmatpush1.bf16.msra.mxu0 %v812
    %995 = vmatprep.subr.bf16.mxu0 %v873
    %996 = vmatpush2.bf16.msra.mxu0 %v872
    %997 = vmatprep.subr.bf16.mxu0 %v869
    %998 = vmatpush2.bf16.msra.mxu0 %v868
    %999 = vmatprep.subr.bf16.mxu0 %v865
    %1000 = vmatpush2.bf16.msra.mxu0 %v864
    %1001 = vmatprep.subr.bf16.mxu0 %v861
    %1002 = vmatpush2.bf16.msra.mxu0 %v860
    %1003 = vmatprep.subr.bf16.mxu0 %v857
    %1004 = vmatpush2.bf16.msra.mxu0 %v856
    %1005 = vmatprep.subr.bf16.mxu0 %v853
    %1006 = vmatpush2.bf16.msra.mxu0 %v852
    %1007 = vmatprep.subr.bf16.mxu0 %v849
    %1008 = vmatpush2.bf16.msra.mxu0 %v848
    %1009 = vmatprep.subr.bf16.mxu0 %v845
    %1010 = vmatpush2.bf16.msra.mxu0 %v844
    %1011 = vmatprep.mubr.bf16.mxu0 %v615
    %1012 = vmatmul.mubr.bf16.gmra.mxu0 %v614
    %v1013 = vpop.f32.mrf.mxu0
    %v1014 = vadd.f32 0.0, %v1013
    %v1015 = vpop.f32.mrf.mxu0
    %v1016 = vadd.f32 0.0, %v1015
    %v1017 = vpop.f32.mrf.mxu0
    %v1018 = vpop.f32.mrf.mxu0
    %1019 = vdwg.mxu0
    %v1024 = vcombine.low %v973, %v975
    %v1025 = vcombine.low %v1014, %v1016
    %v1027 = vunpack.c.l.s4 1966171168
    %v1028 = vunpack.c.0.s8 %v1027
    %v1029 = vlaneseq
    %v1030 = vshrl.u32 %v1029, 7
    %v1031 = vsub.s32 %v1028, %v1030
    %v1032 = vrot.slane %v1024, %v1031
    %v1034 = vunpack.c.l.s4 1966171168
    %v1035 = vunpack.c.0.s8 %v1034
    %v1036 = vlaneseq
    %v1037 = vshrl.u32 %v1036, 7
    %v1038 = vsub.s32 %v1035, %v1037
    %v1039 = vrot.slane %v1025, %v1038
    %v1040 = vcombine.low %v1032, %v1039
    %v1041 = vcombine.high %v1032, %v1039
    %v1043 = vunpack.c.l.s4 1966171168
    %v1044 = vunpack.c.0.s8 %v1043
    %v1045 = vlaneseq
    %v1046 = vshrl.u32 %v1045, 7
    %v1047 = vsub.s32 %v1044, %v1046
    %v1048 = vrot.slane %v1040, %v1047
    %v1050 = vunpack.c.l.s4 1966171168
    %v1051 = vunpack.c.0.s8 %v1050
    %v1052 = vlaneseq
    %v1053 = vshrl.u32 %v1052, 7
    %v1054 = vsub.s32 %v1051, %v1053
    %v1055 = vrot.slane %v1041, %v1054
    %v1056 = vcombine.high %v1048, %v1048
    %v1057 = vcombine.high %v1055, %v1055
    %v1058 = vlaneseq
    %v1059 = vshrl.u32 %v1058, 7
    %v1060 = vsub.s32 0, %v1059
    %v1061 = vrot.slane %v1048, %v1060
    %v1062 = vlaneseq
    %v1063 = vshrl.u32 %v1062, 7
    %v1064 = vsub.s32 1, %v1063
    %v1065 = vrot.slane %v1048, %v1064
    %v1066 = vlaneseq
    %v1067 = vshrl.u32 %v1066, 7
    %v1068 = vsub.s32 2, %v1067
    %v1069 = vrot.slane %v1048, %v1068
    %v1070 = vlaneseq
    %v1071 = vshrl.u32 %v1070, 7
    %v1072 = vsub.s32 3, %v1071
    %v1073 = vrot.slane %v1048, %v1072
    %v1074 = vlaneseq
    %v1075 = vshrl.u32 %v1074, 7
    %v1076 = vsub.s32 0, %v1075
    %v1077 = vrot.slane %v1055, %v1076
    %v1078 = vlaneseq
    %v1079 = vshrl.u32 %v1078, 7
    %v1080 = vsub.s32 1, %v1079
    %v1081 = vrot.slane %v1055, %v1080
    %v1082 = vlaneseq
    %v1083 = vshrl.u32 %v1082, 7
    %v1084 = vsub.s32 2, %v1083
    %v1085 = vrot.slane %v1055, %v1084
    %v1086 = vlaneseq
    %v1087 = vshrl.u32 %v1086, 7
    %v1088 = vsub.s32 3, %v1087
    %v1089 = vrot.slane %v1055, %v1088
    %v1090 = vlaneseq
    %v1091 = vshrl.u32 %v1090, 7
    %v1092 = vsub.s32 0, %v1091
    %v1093 = vrot.slane %v1056, %v1092
    %v1094 = vlaneseq
    %v1095 = vshrl.u32 %v1094, 7
    %v1096 = vsub.s32 1, %v1095
    %v1097 = vrot.slane %v1056, %v1096
    %v1098 = vlaneseq
    %v1099 = vshrl.u32 %v1098, 7
    %v1100 = vsub.s32 2, %v1099
    %v1101 = vrot.slane %v1056, %v1100
    %v1102 = vlaneseq
    %v1103 = vshrl.u32 %v1102, 7
    %v1104 = vsub.s32 3, %v1103
    %v1105 = vrot.slane %v1056, %v1104
    %v1106 = vlaneseq
    %v1107 = vshrl.u32 %v1106, 7
    %v1108 = vsub.s32 0, %v1107
    %v1109 = vrot.slane %v1057, %v1108
    %v1110 = vlaneseq
    %v1111 = vshrl.u32 %v1110, 7
    %v1112 = vsub.s32 1, %v1111
    %v1113 = vrot.slane %v1057, %v1112
    %v1114 = vlaneseq
    %v1115 = vshrl.u32 %v1114, 7
    %v1116 = vsub.s32 2, %v1115
    %v1117 = vrot.slane %v1057, %v1116
    %v1118 = vlaneseq
    %v1119 = vshrl.u32 %v1118, 7
    %v1120 = vsub.s32 3, %v1119
    %v1121 = vrot.slane %v1057, %v1120
    %v1138 = vadd.f32 %v1061, %v501
    %v1139 = vadd.f32 %v1065, %v503
    %v1140 = vadd.f32 %v1069, %v542
    %v1141 = vadd.f32 %v1073, %v544
    %v1142 = vadd.f32 %v1077, %v501
    %v1143 = vadd.f32 %v1081, %v503
    %v1144 = vadd.f32 %v1085, %v542
    %v1145 = vadd.f32 %v1089, %v544
    %v1146 = vadd.f32 %v1093, %v501
    %v1147 = vadd.f32 %v1097, %v503
    %v1148 = vadd.f32 %v1101, %v542
    %v1149 = vadd.f32 %v1105, %v544
    %v1150 = vadd.f32 %v1109, %v501
    %v1151 = vadd.f32 %v1113, %v503
    %v1152 = vadd.f32 %v1117, %v542
    %v1153 = vadd.f32 %v1121, %v544
    %v1154 = vld [vmem:[%s4] ss:$8 sm:$0xf]
    %v1156 = vlaneseq
    %v1157 = vshrl.u32 %v1156, 7
    %v1158 = vsub.s32 0, %v1157
    %v1159 = vrot.slane %v1154, %v1158
    %v1160 = vlaneseq
    %v1161 = vshrl.u32 %v1160, 7
    %v1162 = vsub.s32 1, %v1161
    %v1163 = vrot.slane %v1154, %v1162
    %v1164 = vlaneseq
    %v1165 = vshrl.u32 %v1164, 7
    %v1166 = vsub.s32 2, %v1165
    %v1167 = vrot.slane %v1154, %v1166
    %v1168 = vlaneseq
    %v1169 = vshrl.u32 %v1168, 7
    %v1170 = vsub.s32 3, %v1169
    %v1171 = vrot.slane %v1154, %v1170
    %v1176 = vadd.f32 %v1138, %v1159
    %v1177 = vadd.f32 %v1139, %v1163
    %v1178 = vadd.f32 %v1140, %v1167
    %v1179 = vadd.f32 %v1141, %v1171
    %v1180 = vadd.f32 %v1142, %v1159
    %v1181 = vadd.f32 %v1143, %v1163
    %v1182 = vadd.f32 %v1144, %v1167
    %v1183 = vadd.f32 %v1145, %v1171
    %v1184 = vadd.f32 %v1146, %v1159
    %v1185 = vadd.f32 %v1147, %v1163
    %v1186 = vadd.f32 %v1148, %v1167
    %v1187 = vadd.f32 %v1149, %v1171
    %v1188 = vadd.f32 %v1150, %v1159
    %v1189 = vadd.f32 %v1151, %v1163
    %v1190 = vadd.f32 %v1152, %v1167
    %v1191 = vadd.f32 %v1153, %v1171
    %vm1192 = vcmp.ge.f32.partialorder %v1176, 0.0
    %vm1193 = vcmp.ge.f32.partialorder %v1177, 0.0
    %vm1194 = vcmp.ge.f32.partialorder %v1180, 0.0
    %vm1195 = vcmp.ge.f32.partialorder %v1181, 0.0
    %vm1196 = vcmp.ge.f32.partialorder %v1184, 0.0
    %vm1197 = vcmp.ge.f32.partialorder %v1185, 0.0
    %vm1198 = vcmp.ge.f32.partialorder %v1188, 0.0
    %vm1199 = vcmp.ge.f32.partialorder %v1189, 0.0
    %v1200 = vmul.f32 %v1176, 0.01
    %v1201 = vmul.f32 %v1177, 0.01
    %v1202 = vmul.f32 %v1180, 0.01
    %v1203 = vmul.f32 %v1181, 0.01
    %v1204 = vmul.f32 %v1184, 0.01
    %v1205 = vmul.f32 %v1185, 0.01
    %v1206 = vmul.f32 %v1188, 0.01
    %v1207 = vmul.f32 %v1189, 0.01
    %v1208 = vsel %vm1192, %v1176, %v1200
    %v1209 = vsel %vm1193, %v1177, %v1201
    %v1210 = vsel %vm1194, %v1180, %v1202
    %v1211 = vsel %vm1195, %v1181, %v1203
    %v1212 = vsel %vm1196, %v1184, %v1204
    %v1213 = vsel %vm1197, %v1185, %v1205
    %v1214 = vsel %vm1198, %v1188, %v1206
    %v1215 = vsel %vm1199, %v1189, %v1207
    %v1216 = vpack.c.bf16 %v1210, %v1208
    %v1217 = vpack.c.bf16 %v1211, %v1209
    %v1218 = vpack.c.bf16 %v1214, %v1212
    %v1219 = vpack.c.bf16 %v1215, %v1213
    %v1220 = vld [vmem:[#allocation6] sm:$0xf]
    %v1221 = vld [vmem:[#allocation6 + $0x4] sm:$0xf]
    %v1222 = vld [vmem:[#allocation6 + $0x8] sm:$0xf]
    %v1223 = vld [vmem:[#allocation6 + $0xc] sm:$0xf]
    %v1224 = vld [vmem:[#allocation6 + $0x10] sm:$0xf]
    %v1225 = vld [vmem:[#allocation6 + $0x14] sm:$0xf]
    %v1226 = vld [vmem:[#allocation6 + $0x18] sm:$0xf]
    %v1227 = vld [vmem:[#allocation6 + $0x1c] sm:$0xf]
    %v1228 = vld [vmem:[#allocation6 + $0x20] sm:$0xf]
    %v1229 = vld [vmem:[#allocation6 + $0x24] sm:$0xf]
    %v1230 = vld [vmem:[#allocation6 + $0x28] sm:$0xf]
    %v1231 = vld [vmem:[#allocation6 + $0x2c] sm:$0xf]
    %v1232 = vld [vmem:[#allocation6 + $0x30] sm:$0xf]
    %v1233 = vld [vmem:[#allocation6 + $0x34] sm:$0xf]
    %v1234 = vld [vmem:[#allocation6 + $0x38] sm:$0xf]
    %v1235 = vld [vmem:[#allocation6 + $0x3c] sm:$0xf]
    %v1236 = vld [vmem:[#allocation6 + $0x40] sm:$0xf]
    %v1237 = vld [vmem:[#allocation6 + $0x44] sm:$0xf]
    %v1238 = vld [vmem:[#allocation6 + $0x48] sm:$0xf]
    %v1239 = vld [vmem:[#allocation6 + $0x4c] sm:$0xf]
    %v1240 = vld [vmem:[#allocation6 + $0x50] sm:$0xf]
    %v1241 = vld [vmem:[#allocation6 + $0x54] sm:$0xf]
    %v1242 = vld [vmem:[#allocation6 + $0x58] sm:$0xf]
    %v1243 = vld [vmem:[#allocation6 + $0x5c] sm:$0xf]
    %v1244 = vld [vmem:[#allocation6 + $0x60] sm:$0xf]
    %v1245 = vld [vmem:[#allocation6 + $0x64] sm:$0xf]
    %v1246 = vld [vmem:[#allocation6 + $0x68] sm:$0xf]
    %v1247 = vld [vmem:[#allocation6 + $0x6c] sm:$0xf]
    %v1248 = vld [vmem:[#allocation6 + $0x70] sm:$0xf]
    %v1249 = vld [vmem:[#allocation6 + $0x74] sm:$0xf]
    %v1250 = vld [vmem:[#allocation6 + $0x78] sm:$0xf]
    %v1251 = vld [vmem:[#allocation6 + $0x7c] sm:$0xf]
    %v1252 = vld [vmem:[%s4 + $0x1] ss:$0 sm:$0xff]
    %v1285 = vunpack.c.l.b16 %v1220
    %v1286 = vunpack.c.l.b16 %v1221
    %v1287 = vunpack.c.l.b16 %v1222
    %v1288 = vunpack.c.l.b16 %v1223
    %v1289 = vunpack.c.l.b16 %v1224
    %v1290 = vunpack.c.l.b16 %v1225
    %v1291 = vunpack.c.l.b16 %v1226
    %v1292 = vunpack.c.l.b16 %v1227
    %v1293 = vunpack.c.l.b16 %v1228
    %v1294 = vunpack.c.l.b16 %v1229
    %v1295 = vunpack.c.l.b16 %v1230
    %v1296 = vunpack.c.l.b16 %v1231
    %v1297 = vunpack.c.l.b16 %v1232
    %v1298 = vunpack.c.l.b16 %v1233
    %v1299 = vunpack.c.l.b16 %v1234
    %v1300 = vunpack.c.l.b16 %v1235
    %v1301 = vunpack.c.l.b16 %v1236
    %v1302 = vunpack.c.l.b16 %v1237
    %v1303 = vunpack.c.l.b16 %v1238
    %v1304 = vunpack.c.l.b16 %v1239
    %v1305 = vunpack.c.l.b16 %v1240
    %v1306 = vunpack.c.l.b16 %v1241
    %v1307 = vunpack.c.l.b16 %v1242
    %v1308 = vunpack.c.l.b16 %v1243
    %v1309 = vunpack.c.l.b16 %v1244
    %v1310 = vunpack.c.l.b16 %v1245
    %v1311 = vunpack.c.l.b16 %v1246
    %v1312 = vunpack.c.l.b16 %v1247
    %v1313 = vunpack.c.l.b16 %v1248
    %v1314 = vunpack.c.l.b16 %v1249
    %v1315 = vunpack.c.l.b16 %v1250
    %v1316 = vunpack.c.l.b16 %v1251
    %v1317 = vpack.c.b16 %v1286, %v1285
    %v1318 = vpack.c.b16 %v1288, %v1287
    %v1319 = vpack.c.b16 %v1290, %v1289
    %v1320 = vpack.c.b16 %v1292, %v1291
    %v1321 = vpack.c.b16 %v1294, %v1293
    %v1322 = vpack.c.b16 %v1296, %v1295
    %v1323 = vpack.c.b16 %v1298, %v1297
    %v1324 = vpack.c.b16 %v1300, %v1299
    %v1325 = vpack.c.b16 %v1302, %v1301
    %v1326 = vpack.c.b16 %v1304, %v1303
    %v1327 = vpack.c.b16 %v1306, %v1305
    %v1328 = vpack.c.b16 %v1308, %v1307
    %v1329 = vpack.c.b16 %v1310, %v1309
    %v1330 = vpack.c.b16 %v1312, %v1311
    %v1331 = vpack.c.b16 %v1314, %v1313
    %v1332 = vpack.c.b16 %v1316, %v1315
    %1349 = vmatprep.subr.bf16.mxu0 0
    %1350 = vmatpush1.bf16.msra.mxu0 %v1324
    %1351 = vmatprep.subr.bf16.mxu0 0
    %1352 = vmatpush1.bf16.msra.mxu0 %v1323
    %1353 = vmatprep.subr.bf16.mxu0 0
    %1354 = vmatpush1.bf16.msra.mxu0 %v1322
    %1355 = vmatprep.subr.bf16.mxu0 0
    %1356 = vmatpush1.bf16.msra.mxu0 %v1321
    %1357 = vmatprep.subr.bf16.mxu0 0
    %1358 = vmatpush1.bf16.msra.mxu0 %v1320
    %1359 = vmatprep.subr.bf16.mxu0 0
    %1360 = vmatpush1.bf16.msra.mxu0 %v1319
    %1361 = vmatprep.subr.bf16.mxu0 0
    %1362 = vmatpush1.bf16.msra.mxu0 %v1318
    %1363 = vmatprep.subr.bf16.mxu0 0
    %1364 = vmatpush1.bf16.msra.mxu0 %v1317
    %1365 = vmatprep.subr.bf16.mxu0 0
    %1366 = vmatpush2.bf16.msra.mxu0 %v1332
    %1367 = vmatprep.subr.bf16.mxu0 0
    %1368 = vmatpush2.bf16.msra.mxu0 %v1331
    %1369 = vmatprep.subr.bf16.mxu0 0
    %1370 = vmatpush2.bf16.msra.mxu0 %v1330
    %1371 = vmatprep.subr.bf16.mxu0 0
    %1372 = vmatpush2.bf16.msra.mxu0 %v1329
    %1373 = vmatprep.subr.bf16.mxu0 0
    %1374 = vmatpush2.bf16.msra.mxu0 %v1328
    %1375 = vmatprep.subr.bf16.mxu0 0
    %1376 = vmatpush2.bf16.msra.mxu0 %v1327
    %1377 = vmatprep.subr.bf16.mxu0 0
    %1378 = vmatpush2.bf16.msra.mxu0 %v1326
    %1379 = vmatprep.subr.bf16.mxu0 0
    %1380 = vmatpush2.bf16.msra.mxu0 %v1325
    %1381 = vmatprep.mubr.bf16.mxu0 %v1217
    %1382 = vmatmul.mubr.bf16.gmra.mxu0 %v1216
    %v1383 = vpop.f32.mrf.mxu0
    %v1384 = vadd.f32 %v1252, %v1383
    %v1385 = vpop.f32.mrf.mxu0
    %v1386 = vpop.f32.mrf.mxu0
    %v1387 = vadd.f32 %v1252, %v1386
    %v1388 = vpop.f32.mrf.mxu0
    %1389 = vmatprep.mubr.bf16.mxu0 %v1219
    %1390 = vmatmul.mubr.bf16.gmra.mxu0 %v1218
    %v1391 = vpop.f32.mrf.mxu0
    %v1392 = vadd.f32 %v1252, %v1391
    %v1393 = vpop.f32.mrf.mxu0
    %v1394 = vpop.f32.mrf.mxu0
    %v1395 = vadd.f32 %v1252, %v1394
    %v1396 = vpop.f32.mrf.mxu0
    %1397 = vdwg.mxu0
    %vm1398 = vcmp.ge.f32.partialorder %v1384, 0.0
    %vm1399 = vcmp.ge.f32.partialorder %v1387, 0.0
    %vm1400 = vcmp.ge.f32.partialorder %v1392, 0.0
    %vm1401 = vcmp.ge.f32.partialorder %v1395, 0.0
    %v1402 = vmul.f32 %v1384, 0.01
    %v1403 = vmul.f32 %v1387, 0.01
    %v1404 = vmul.f32 %v1392, 0.01
    %v1405 = vmul.f32 %v1395, 0.01
    %v1406 = vsel %vm1398, %v1384, %v1402
    %v1407 = vsel %vm1399, %v1387, %v1403
    %v1408 = vsel %vm1400, %v1392, %v1404
    %v1409 = vsel %vm1401, %v1395, %v1405
    %v1410 = vpack.c.bf16 %v1407, %v1406
    %v1411 = vpack.c.bf16 %v1409, %v1408
    %v1412 = vld [vmem:[#allocation6 + $0x100] sm:$0xf]
    %v1413 = vld [vmem:[#allocation6 + $0x104] sm:$0xf]
    %v1414 = vld [vmem:[#allocation6 + $0x108] sm:$0xf]
    %v1415 = vld [vmem:[#allocation6 + $0x10c] sm:$0xf]
    %v1416 = vld [vmem:[#allocation6 + $0x110] sm:$0xf]
    %v1417 = vld [vmem:[#allocation6 + $0x114] sm:$0xf]
    %v1418 = vld [vmem:[#allocation6 + $0x118] sm:$0xf]
    %v1419 = vld [vmem:[#allocation6 + $0x11c] sm:$0xf]
    %v1420 = vld [vmem:[#allocation6 + $0x120] sm:$0xf]
    %v1421 = vld [vmem:[#allocation6 + $0x124] sm:$0xf]
    %v1422 = vld [vmem:[#allocation6 + $0x128] sm:$0xf]
    %v1423 = vld [vmem:[#allocation6 + $0x12c] sm:$0xf]
    %v1424 = vld [vmem:[#allocation6 + $0x130] sm:$0xf]
    %v1425 = vld [vmem:[#allocation6 + $0x134] sm:$0xf]
    %v1426 = vld [vmem:[#allocation6 + $0x138] sm:$0xf]
    %v1427 = vld [vmem:[#allocation6 + $0x13c] sm:$0xf]
    %v1428 = vld [vmem:[%s4 + $0x3] ss:$0 sm:$0xff]
    %v1445 = vunpack.c.l.b16 %v1412
    %v1446 = vunpack.c.l.b16 %v1413
    %v1447 = vunpack.c.l.b16 %v1414
    %v1448 = vunpack.c.l.b16 %v1415
    %v1449 = vunpack.c.l.b16 %v1416
    %v1450 = vunpack.c.l.b16 %v1417
    %v1451 = vunpack.c.l.b16 %v1418
    %v1452 = vunpack.c.l.b16 %v1419
    %v1453 = vunpack.c.l.b16 %v1420
    %v1454 = vunpack.c.l.b16 %v1421
    %v1455 = vunpack.c.l.b16 %v1422
    %v1456 = vunpack.c.l.b16 %v1423
    %v1457 = vunpack.c.l.b16 %v1424
    %v1458 = vunpack.c.l.b16 %v1425
    %v1459 = vunpack.c.l.b16 %v1426
    %v1460 = vunpack.c.l.b16 %v1427
    %v1461 = vpack.c.b16 %v1446, %v1445
    %v1462 = vpack.c.b16 %v1448, %v1447
    %v1463 = vpack.c.b16 %v1450, %v1449
    %v1464 = vpack.c.b16 %v1452, %v1451
    %v1465 = vpack.c.b16 %v1454, %v1453
    %v1466 = vpack.c.b16 %v1456, %v1455
    %v1467 = vpack.c.b16 %v1458, %v1457
    %v1468 = vpack.c.b16 %v1460, %v1459
    %1477 = vmatprep.subr.bf16.mxu0 0
    %1478 = vmatpush1.bf16.msra.mxu0 %v1468
    %1479 = vmatprep.subr.bf16.mxu0 0
    %1480 = vmatpush1.bf16.msra.mxu0 %v1467
    %1481 = vmatprep.subr.bf16.mxu0 0
    %1482 = vmatpush1.bf16.msra.mxu0 %v1466
    %1483 = vmatprep.subr.bf16.mxu0 0
    %1484 = vmatpush1.bf16.msra.mxu0 %v1465
    %1485 = vmatprep.subr.bf16.mxu0 0
    %1486 = vmatpush1.bf16.msra.mxu0 %v1464
    %1487 = vmatprep.subr.bf16.mxu0 0
    %1488 = vmatpush1.bf16.msra.mxu0 %v1463
    %1489 = vmatprep.subr.bf16.mxu0 0
    %1490 = vmatpush1.bf16.msra.mxu0 %v1462
    %1491 = vmatprep.subr.bf16.mxu0 0
    %1492 = vmatpush1.bf16.msra.mxu0 %v1461
    %1493 = vmatprep.subr.bf16.mxu0 0
    %1494 = vmatpush2.bf16.msra.mxu0 0
    %1495 = vmatprep.subr.bf16.mxu0 0
    %1496 = vmatpush2.bf16.msra.mxu0 0
    %1497 = vmatprep.subr.bf16.mxu0 0
    %1498 = vmatpush2.bf16.msra.mxu0 0
    %1499 = vmatprep.subr.bf16.mxu0 0
    %1500 = vmatpush2.bf16.msra.mxu0 0
    %1501 = vmatprep.subr.bf16.mxu0 0
    %1502 = vmatpush2.bf16.msra.mxu0 0
    %1503 = vmatprep.subr.bf16.mxu0 0
    %1504 = vmatpush2.bf16.msra.mxu0 0
    %1505 = vmatprep.subr.bf16.mxu0 0
    %1506 = vmatpush2.bf16.msra.mxu0 0
    %1507 = vmatprep.subr.bf16.mxu0 0
    %1508 = vmatpush2.bf16.msra.mxu0 0
    %1509 = vmatprep.mubr.bf16.mxu0 0
    %1510 = vmatmul.mubr.bf16.gmra.mxu0 %v1410
    %v1511 = vpop.f32.mrf.mxu0
    %v1512 = vadd.f32 %v1428, %v1511
    %v1513 = vpop.f32.mrf.mxu0
    %v1514 = vpop.f32.mrf.mxu0
    %v1515 = vadd.f32 %v1428, %v1514
    %v1516 = vpop.f32.mrf.mxu0
    %1517 = vmatprep.mubr.bf16.mxu0 0
    %1518 = vmatmul.mubr.bf16.gmra.mxu0 %v1411
    %v1519 = vpop.f32.mrf.mxu0
    %v1520 = vadd.f32 %v1428, %v1519
    %v1521 = vpop.f32.mrf.mxu0
    %v1522 = vpop.f32.mrf.mxu0
    %v1523 = vadd.f32 %v1428, %v1522
    %v1524 = vpop.f32.mrf.mxu0
    %1525 = vdwg.mxu0
    %vm1526 = vcmp.ge.f32.partialorder %v1512, 0.0
    %vm1527 = vcmp.ge.f32.partialorder %v1515, 0.0
    %vm1528 = vcmp.ge.f32.partialorder %v1520, 0.0
    %vm1529 = vcmp.ge.f32.partialorder %v1523, 0.0
    %v1530 = vmul.f32 %v1512, 0.01
    %v1531 = vmul.f32 %v1515, 0.01
    %v1532 = vmul.f32 %v1520, 0.01
    %v1533 = vmul.f32 %v1523, 0.01
    %v1534 = vsel %vm1526, %v1512, %v1530
    %v1535 = vsel %vm1527, %v1515, %v1531
    %v1536 = vsel %vm1528, %v1520, %v1532
    %v1537 = vsel %vm1529, %v1523, %v1533
    %v1538 = vpack.c.bf16 %v1535, %v1534
    %v1539 = vpack.c.bf16 %v1537, %v1536
    %v1540 = vld [vmem:[#allocation6 + $0x180] sm:$0xf]
    %v1541 = vld [vmem:[#allocation6 + $0x184] sm:$0xf]
    %v1542 = vld [vmem:[#allocation6 + $0x188] sm:$0xf]
    %v1543 = vld [vmem:[#allocation6 + $0x18c] sm:$0xf]
    %v1544 = vld [vmem:[#allocation6 + $0x190] sm:$0xf]
    %v1545 = vld [vmem:[#allocation6 + $0x194] sm:$0xf]
    %v1546 = vld [vmem:[#allocation6 + $0x198] sm:$0xf]
    %v1547 = vld [vmem:[#allocation6 + $0x19c] sm:$0xf]
    %v1548 = vld [vmem:[%s4 + $0x5] ss:$0 sm:$0xff]
    %v1557 = vunpack.c.l.b16 %v1540
    %v1558 = vunpack.c.l.b16 %v1541
    %v1559 = vunpack.c.l.b16 %v1542
    %v1560 = vunpack.c.l.b16 %v1543
    %v1561 = vunpack.c.l.b16 %v1544
    %v1562 = vunpack.c.l.b16 %v1545
    %v1563 = vunpack.c.l.b16 %v1546
    %v1564 = vunpack.c.l.b16 %v1547
    %v1565 = vpack.c.b16 %v1558, %v1557
    %v1566 = vpack.c.b16 %v1560, %v1559
    %v1567 = vpack.c.b16 %v1562, %v1561
    %v1568 = vpack.c.b16 %v1564, %v1563
    %vm1573 = vcmask 523264
    %v1575 = vsel %vm1573, %v1538, 0
    %v1578 = vsel %vm1573, %v1539, 0
    %1580 = vmatprep.subr.bf16.mxu0 0
    %1581 = vmatpush1.bf16.msra.mxu0 0
    %1582 = vmatprep.subr.bf16.mxu0 0
    %1583 = vmatpush1.bf16.msra.mxu0 0
    %1584 = vmatprep.subr.bf16.mxu0 0
    %1585 = vmatpush1.bf16.msra.mxu0 0
    %1586 = vmatprep.subr.bf16.mxu0 0
    %1587 = vmatpush1.bf16.msra.mxu0 0
    %1588 = vmatprep.subr.bf16.mxu0 0
    %1589 = vmatpush1.bf16.msra.mxu0 %v1568
    %1590 = vmatprep.subr.bf16.mxu0 0
    %1591 = vmatpush1.bf16.msra.mxu0 %v1567
    %1592 = vmatprep.subr.bf16.mxu0 0
    %1593 = vmatpush1.bf16.msra.mxu0 %v1566
    %1594 = vmatprep.subr.bf16.mxu0 0
    %1595 = vmatpush1.bf16.msra.mxu0 %v1565
    %1596 = vmatprep.subr.bf16.mxu0 0
    %1597 = vmatpush2.bf16.msra.mxu0 0
    %1598 = vmatprep.subr.bf16.mxu0 0
    %1599 = vmatpush2.bf16.msra.mxu0 0
    %1600 = vmatprep.subr.bf16.mxu0 0
    %1601 = vmatpush2.bf16.msra.mxu0 0
    %1602 = vmatprep.subr.bf16.mxu0 0
    %1603 = vmatpush2.bf16.msra.mxu0 0
    %1604 = vmatprep.subr.bf16.mxu0 0
    %1605 = vmatpush2.bf16.msra.mxu0 0
    %1606 = vmatprep.subr.bf16.mxu0 0
    %1607 = vmatpush2.bf16.msra.mxu0 0
    %1608 = vmatprep.subr.bf16.mxu0 0
    %1609 = vmatpush2.bf16.msra.mxu0 0
    %1610 = vmatprep.subr.bf16.mxu0 0
    %1611 = vmatpush2.bf16.msra.mxu0 0
    %1612 = vmatprep.mubr.bf16.mxu0 0
    %1613 = vmatmul.mubr.bf16.gmra.mxu0 %v1575
    %v1614 = vpop.f32.mrf.mxu0
    %v1615 = vadd.f32 %v1548, %v1614
    %v1616 = vpop.f32.mrf.mxu0
    %v1617 = vpop.f32.mrf.mxu0
    %v1618 = vadd.f32 %v1548, %v1617
    %v1619 = vpop.f32.mrf.mxu0
    %1620 = vmatprep.mubr.bf16.mxu0 0
    %1621 = vmatmul.mubr.bf16.gmra.mxu0 %v1578
    %v1622 = vpop.f32.mrf.mxu0
    %v1623 = vadd.f32 %v1548, %v1622
    %v1624 = vpop.f32.mrf.mxu0
    %v1625 = vpop.f32.mrf.mxu0
    %v1626 = vadd.f32 %v1548, %v1625
    %v1627 = vpop.f32.mrf.mxu0
    %1628 = vdwg.mxu0
    %vm1629 = vcmp.ge.f32.partialorder %v1615, 0.0
    %vm1630 = vcmp.ge.f32.partialorder %v1618, 0.0
    %vm1631 = vcmp.ge.f32.partialorder %v1623, 0.0
    %vm1632 = vcmp.ge.f32.partialorder %v1626, 0.0
    %v1633 = vmul.f32 %v1615, 0.01
    %v1634 = vmul.f32 %v1618, 0.01
    %v1635 = vmul.f32 %v1623, 0.01
    %v1636 = vmul.f32 %v1626, 0.01
    %v1637 = vsel %vm1629, %v1615, %v1633
    %v1638 = vsel %vm1630, %v1618, %v1634
    %v1639 = vsel %vm1631, %v1623, %v1635
    %v1640 = vsel %vm1632, %v1626, %v1636
    %v1641 = vpack.c.bf16 %v1638, %v1637
    %v1642 = vpack.c.bf16 %v1640, %v1639
    %v1643 = vld [vmem:[#allocation6 + $0x1c0] sm:$0xf]
    %v1644 = vld [vmem:[#allocation6 + $0x1c4] sm:$0xf]
    %v1645 = vld [vmem:[#allocation6 + $0x1c8] sm:$0xf]
    %v1646 = vld [vmem:[#allocation6 + $0x1cc] sm:$0xf]
    %v1647 = vld [vmem:[%s4 + $0x7] ss:$0 sm:$0xff]
    %v1652 = vunpack.c.l.b16 %v1643
    %v1653 = vunpack.c.l.b16 %v1644
    %v1654 = vunpack.c.l.b16 %v1645
    %v1655 = vunpack.c.l.b16 %v1646
    %v1656 = vpack.c.b16 %v1653, %v1652
    %v1657 = vpack.c.b16 %v1655, %v1654
    %vm1660 = vcmask 261120
    %v1662 = vsel %vm1660, %v1641, 0
    %v1665 = vsel %vm1660, %v1642, 0
    %1667 = vmatprep.subr.bf16.mxu0 0
    %1668 = vmatpush1.bf16.msra.mxu0 0
    %1669 = vmatprep.subr.bf16.mxu0 0
    %1670 = vmatpush1.bf16.msra.mxu0 0
    %1671 = vmatprep.subr.bf16.mxu0 0
    %1672 = vmatpush1.bf16.msra.mxu0 0
    %1673 = vmatprep.subr.bf16.mxu0 0
    %1674 = vmatpush1.bf16.msra.mxu0 0
    %1675 = vmatprep.subr.bf16.mxu0 0
    %1676 = vmatpush1.bf16.msra.mxu0 0
    %1677 = vmatprep.subr.bf16.mxu0 0
    %1678 = vmatpush1.bf16.msra.mxu0 0
    %1679 = vmatprep.subr.bf16.mxu0 0
    %1680 = vmatpush1.bf16.msra.mxu0 %v1657
    %1681 = vmatprep.subr.bf16.mxu0 0
    %1682 = vmatpush1.bf16.msra.mxu0 %v1656
    %1683 = vmatprep.subr.bf16.mxu0 0
    %1684 = vmatpush2.bf16.msra.mxu0 0
    %1685 = vmatprep.subr.bf16.mxu0 0
    %1686 = vmatpush2.bf16.msra.mxu0 0
    %1687 = vmatprep.subr.bf16.mxu0 0
    %1688 = vmatpush2.bf16.msra.mxu0 0
    %1689 = vmatprep.subr.bf16.mxu0 0
    %1690 = vmatpush2.bf16.msra.mxu0 0
    %1691 = vmatprep.subr.bf16.mxu0 0
    %1692 = vmatpush2.bf16.msra.mxu0 0
    %1693 = vmatprep.subr.bf16.mxu0 0
    %1694 = vmatpush2.bf16.msra.mxu0 0
    %1695 = vmatprep.subr.bf16.mxu0 0
    %1696 = vmatpush2.bf16.msra.mxu0 0
    %1697 = vmatprep.subr.bf16.mxu0 0
    %1698 = vmatpush2.bf16.msra.mxu0 0
    %1699 = vmatprep.mubr.bf16.mxu0 0
    %1700 = vmatmul.mubr.bf16.gmra.mxu0 %v1662
    %v1701 = vpop.f32.mrf.mxu0
    %v1702 = vadd.f32 %v1647, %v1701
    %v1703 = vpop.f32.mrf.mxu0
    %v1704 = vpop.f32.mrf.mxu0
    %v1705 = vadd.f32 %v1647, %v1704
    %v1706 = vpop.f32.mrf.mxu0
    %1707 = vmatprep.mubr.bf16.mxu0 0
    %1708 = vmatmul.mubr.bf16.gmra.mxu0 %v1665
    %v1709 = vpop.f32.mrf.mxu0
    %v1710 = vadd.f32 %v1647, %v1709
    %v1711 = vpop.f32.mrf.mxu0
    %v1712 = vpop.f32.mrf.mxu0
    %v1713 = vadd.f32 %v1647, %v1712
    %v1714 = vpop.f32.mrf.mxu0
    %1715 = vdwg.mxu0
    %vm1716 = vcmask 48144
    %v1717 = vsel %vm1716, %v1702, -inf
    %1718 = vmax.xlane.f32.xlu0 %v1717
    %v1719 = vpop.xlane.xlu0 %1718
    %v1720 = vsel %vm1716, %v1705, -inf
    %1721 = vmax.xlane.f32.xlu0 %v1720
    %v1722 = vpop.xlane.xlu0 %1721
    %v1723 = vsel %vm1716, %v1710, -inf
    %1724 = vmax.xlane.f32.xlu0 %v1723
    %v1725 = vpop.xlane.xlu0 %1724
    %v1726 = vsel %vm1716, %v1713, -inf
    %1727 = vmax.xlane.f32.xlu0 %v1726
    %v1728 = vpop.xlane.xlu0 %1727
    %v1729 = vsub.f32 %v1702, %v1719
    %v1730 = vsub.f32 %v1705, %v1722
    %v1731 = vsub.f32 %v1710, %v1725
    %v1732 = vsub.f32 %v1713, %v1728
    %v1733 = vmul.f32 %v1729, 1.442695
    %v1734 = vpow.pop %v1733
    %v1735 = vmul.f32 %v1730, 1.442695
    %v1736 = vpow.pop %v1735
    %v1737 = vmul.f32 %v1731, 1.442695
    %v1738 = vpow.pop %v1737
    %v1739 = vmul.f32 %v1732, 1.442695
    %v1740 = vpow.pop %v1739
    %1745 = vrot.lane.b32.xlu0 %v1734, 126
    %v1746 = vpop.permute.xlu0 %1745
    %1747 = vrot.lane.b32.xlu0 %v1736, 126
    %v1748 = vpop.permute.xlu0 %1747
    %1749 = vrot.lane.b32.xlu0 %v1738, 126
    %v1750 = vpop.permute.xlu0 %1749
    %1751 = vrot.lane.b32.xlu0 %v1740, 126
    %v1752 = vpop.permute.xlu0 %1751
    %vm1757 = vcmask 31744
    %v1758 = vsel %vm1757, %v1746, 0.0
    %1759 = vadd.xlane.f32.xlu0 %v1758
    %v1760 = vpop.xlane.xlu0 %1759
    %v1761 = vsel %vm1757, %v1748, 0.0
    %1762 = vadd.xlane.f32.xlu0 %v1761
    %v1763 = vpop.xlane.xlu0 %1762
    %v1764 = vsel %vm1757, %v1750, 0.0
    %1765 = vadd.xlane.f32.xlu0 %v1764
    %v1766 = vpop.xlane.xlu0 %1765
    %v1767 = vsel %vm1757, %v1752, 0.0
    %1768 = vadd.xlane.f32.xlu0 %v1767
    %v1769 = vpop.xlane.xlu0 %1768
    %v1770 = vrcp.pop %v1760
    %v1771 = vrcp.pop %v1763
    %v1772 = vrcp.pop %v1766
    %v1773 = vrcp.pop %v1769
    %v1774 = vmul.f32 %v1734, %v1770
    %v1775 = vmul.f32 %v1736, %v1771
    %v1776 = vmul.f32 %v1738, %v1772
    %v1777 = vmul.f32 %v1740, %v1773
    %1779 = vrot.lane.b32.xlu0 %v1774, 126
    %v1780 = vpop.permute.xlu0 %1779
    %1783 = vrot.lane.b32.xlu0 %v1775, 2
    %v1784 = vpop.permute.xlu0 %1783
    %1787 = vrot.lane.b32.xlu0 %v1776, 6
    %v1788 = vpop.permute.xlu0 %1787
    %1791 = vrot.lane.b32.xlu0 %v1777, 10
    %v1792 = vpop.permute.xlu0 %1791
    %v1794 = vsel %vm1757, %v1780, %v1784
    %vm1795 = vcmask 64512
    %v1796 = vsel %vm1795, %v1794, %v1788
    %vm1797 = vcmask 97280
    %v1798 = vsel %vm1797, %v1796, %v1792
    %vm1799 = vcmask 130048
    %1800 = vst.msk [vmem:[%s6] sm:$0xff] %vm1799, %v1798
    %v1801 = vpack.c.bf16 %v1775, %v1774
    %v1802 = vpack.c.bf16 %v1777, %v1776
    %v1803 = vld [vmem:[#allocation5 + $0x408] sm:$0x33]
    %1806 = vrot.lane.b32.xlu0 %v1801, 126
    %v1807 = vpop.permute.xlu0 %1806
    %1808 = vrot.lane.b32.xlu0 %v1802, 126
    %v1809 = vpop.permute.xlu0 %1808
    %v1811 = vunpack.c.l.b16 %v1803
    %v1812 = vunpack.c.h.b16 %v1803
    %v1813 = vpack.c.b16 %v1811, %v1811
    %v1814 = vpack.c.b16 %v1812, %v1812
    %v1816 = vsel %vm1757, %v1807, 0
    %v1819 = vsel %vm1757, %v1809, 0
    %vm1821 = vcmask 1041408
    %v1823 = vsel %vm1821, %v1813, 0
    %v1826 = vsel %vm1821, %v1814, 0
    %1828 = vmatprep.subr.bf16.mxu0 0
    %1829 = vmatpush1.bf16.msra.mxu0 0
    %1830 = vmatprep.subr.bf16.mxu0 0
    %1831 = vmatpush1.bf16.msra.mxu0 0
    %1832 = vmatprep.subr.bf16.mxu0 0
    %1833 = vmatpush1.bf16.msra.mxu0 0
    %1834 = vmatprep.subr.bf16.mxu0 0
    %1835 = vmatpush1.bf16.msra.mxu0 0
    %1836 = vmatprep.subr.bf16.mxu0 0
    %1837 = vmatpush1.bf16.msra.mxu0 0
    %1838 = vmatprep.subr.bf16.mxu0 0
    %1839 = vmatpush1.bf16.msra.mxu0 0
    %1840 = vmatprep.subr.bf16.mxu0 0
    %1841 = vmatpush1.bf16.msra.mxu0 0
    %1842 = vmatprep.subr.bf16.mxu0 %v1826
    %1843 = vmatpush1.bf16.msra.mxu0 %v1823
    %1844 = vmatprep.subr.bf16.mxu0 0
    %1845 = vmatpush2.bf16.msra.mxu0 0
    %1846 = vmatprep.subr.bf16.mxu0 0
    %1847 = vmatpush2.bf16.msra.mxu0 0
    %1848 = vmatprep.subr.bf16.mxu0 0
    %1849 = vmatpush2.bf16.msra.mxu0 0
    %1850 = vmatprep.subr.bf16.mxu0 0
    %1851 = vmatpush2.bf16.msra.mxu0 0
    %1852 = vmatprep.subr.bf16.mxu0 0
    %1853 = vmatpush2.bf16.msra.mxu0 0
    %1854 = vmatprep.subr.bf16.mxu0 0
    %1855 = vmatpush2.bf16.msra.mxu0 0
    %1856 = vmatprep.subr.bf16.mxu0 0
    %1857 = vmatpush2.bf16.msra.mxu0 0
    %1858 = vmatprep.subr.bf16.mxu0 0
    %1859 = vmatpush2.bf16.msra.mxu0 0
    %1860 = vmatprep.mubr.bf16.mxu0 0
    %1861 = vmatmul.mubr.bf16.gmra.mxu0 %v1816
    %v1862 = vpop.f32.mrf.mxu0
    %v1863 = vadd.f32 0.0, %v1862
    %v1864 = vpop.f32.mrf.mxu0
    %v1865 = vadd.f32 0.0, %v1864
    %v1866 = vpop.f32.mrf.mxu0
    %v1867 = vadd.f32 0.0, %v1866
    %v1868 = vpop.f32.mrf.mxu0
    %v1869 = vadd.f32 0.0, %v1868
    %1870 = vmatprep.mubr.bf16.mxu0 0
    %1871 = vmatmul.mubr.bf16.gmra.mxu0 %v1819
    %v1872 = vpop.f32.mrf.mxu0
    %v1873 = vadd.f32 0.0, %v1872
    %v1874 = vpop.f32.mrf.mxu0
    %v1875 = vadd.f32 0.0, %v1874
    %v1876 = vpop.f32.mrf.mxu0
    %v1877 = vadd.f32 0.0, %v1876
    %v1878 = vpop.f32.mrf.mxu0
    %v1879 = vadd.f32 0.0, %v1878
    %1880 = vdwg.mxu0
    %v1881 = vadd.f32 %v1178, %v1863
    %v1882 = vadd.f32 %v1179, %v1865
    %v1883 = vadd.f32 %v1182, %v1867
    %v1884 = vadd.f32 %v1183, %v1869
    %v1885 = vadd.f32 %v1186, %v1873
    %v1886 = vadd.f32 %v1187, %v1875
    %v1887 = vadd.f32 %v1190, %v1877
    %v1888 = vadd.f32 %v1191, %v1879
    %vm1889 = vcmp.ge.f32.partialorder %v1881, 0.0
    %vm1890 = vcmp.ge.f32.partialorder %v1882, 0.0
    %vm1891 = vcmp.ge.f32.partialorder %v1883, 0.0
    %vm1892 = vcmp.ge.f32.partialorder %v1884, 0.0
    %vm1893 = vcmp.ge.f32.partialorder %v1885, 0.0
    %vm1894 = vcmp.ge.f32.partialorder %v1886, 0.0
    %vm1895 = vcmp.ge.f32.partialorder %v1887, 0.0
    %vm1896 = vcmp.ge.f32.partialorder %v1888, 0.0
    %v1897 = vmul.f32 %v1881, 0.01
    %v1898 = vmul.f32 %v1882, 0.01
    %v1899 = vmul.f32 %v1883, 0.01
    %v1900 = vmul.f32 %v1884, 0.01
    %v1901 = vmul.f32 %v1885, 0.01
    %v1902 = vmul.f32 %v1886, 0.01
    %v1903 = vmul.f32 %v1887, 0.01
    %v1904 = vmul.f32 %v1888, 0.01
    %v1905 = vsel %vm1889, %v1881, %v1897
    %v1906 = vsel %vm1890, %v1882, %v1898
    %v1907 = vsel %vm1891, %v1883, %v1899
    %v1908 = vsel %vm1892, %v1884, %v1900
    %v1909 = vsel %vm1893, %v1885, %v1901
    %v1910 = vsel %vm1894, %v1886, %v1902
    %v1911 = vsel %vm1895, %v1887, %v1903
    %v1912 = vsel %vm1896, %v1888, %v1904
    %v1913 = vpack.c.bf16 %v1907, %v1905
    %v1914 = vpack.c.bf16 %v1908, %v1906
    %v1915 = vpack.c.bf16 %v1911, %v1909
    %v1916 = vpack.c.bf16 %v1912, %v1910
    %v1917 = vld [vmem:[#allocation6 + $0x80] sm:$0xf]
    %v1918 = vld [vmem:[#allocation6 + $0x84] sm:$0xf]
    %v1919 = vld [vmem:[#allocation6 + $0x88] sm:$0xf]
    %v1920 = vld [vmem:[#allocation6 + $0x8c] sm:$0xf]
    %v1921 = vld [vmem:[#allocation6 + $0x90] sm:$0xf]
    %v1922 = vld [vmem:[#allocation6 + $0x94] sm:$0xf]
    %v1923 = vld [vmem:[#allocation6 + $0x98] sm:$0xf]
    %v1924 = vld [vmem:[#allocation6 + $0x9c] sm:$0xf]
    %v1925 = vld [vmem:[#allocation6 + $0xa0] sm:$0xf]
    %v1926 = vld [vmem:[#allocation6 + $0xa4] sm:$0xf]
    %v1927 = vld [vmem:[#allocation6 + $0xa8] sm:$0xf]
    %v1928 = vld [vmem:[#allocation6 + $0xac] sm:$0xf]
    %v1929 = vld [vmem:[#allocation6 + $0xb0] sm:$0xf]
    %v1930 = vld [vmem:[#allocation6 + $0xb4] sm:$0xf]
    %v1931 = vld [vmem:[#allocation6 + $0xb8] sm:$0xf]
    %v1932 = vld [vmem:[#allocation6 + $0xbc] sm:$0xf]
    %v1933 = vld [vmem:[#allocation6 + $0xc0] sm:$0xf]
    %v1934 = vld [vmem:[#allocation6 + $0xc4] sm:$0xf]
    %v1935 = vld [vmem:[#allocation6 + $0xc8] sm:$0xf]
    %v1936 = vld [vmem:[#allocation6 + $0xcc] sm:$0xf]
    %v1937 = vld [vmem:[#allocation6 + $0xd0] sm:$0xf]
    %v1938 = vld [vmem:[#allocation6 + $0xd4] sm:$0xf]
    %v1939 = vld [vmem:[#allocation6 + $0xd8] sm:$0xf]
    %v1940 = vld [vmem:[#allocation6 + $0xdc] sm:$0xf]
    %v1941 = vld [vmem:[#allocation6 + $0xe0] sm:$0xf]
    %v1942 = vld [vmem:[#allocation6 + $0xe4] sm:$0xf]
    %v1943 = vld [vmem:[#allocation6 + $0xe8] sm:$0xf]
    %v1944 = vld [vmem:[#allocation6 + $0xec] sm:$0xf]
    %v1945 = vld [vmem:[#allocation6 + $0xf0] sm:$0xf]
    %v1946 = vld [vmem:[#allocation6 + $0xf4] sm:$0xf]
    %v1947 = vld [vmem:[#allocation6 + $0xf8] sm:$0xf]
    %v1948 = vld [vmem:[#allocation6 + $0xfc] sm:$0xf]
    %v1949 = vld [vmem:[%s4 + $0x2] ss:$0 sm:$0xff]
    %v1982 = vunpack.c.l.b16 %v1917
    %v1983 = vunpack.c.l.b16 %v1918
    %v1984 = vunpack.c.l.b16 %v1919
    %v1985 = vunpack.c.l.b16 %v1920
    %v1986 = vunpack.c.l.b16 %v1921
    %v1987 = vunpack.c.l.b16 %v1922
    %v1988 = vunpack.c.l.b16 %v1923
    %v1989 = vunpack.c.l.b16 %v1924
    %v1990 = vunpack.c.l.b16 %v1925
    %v1991 = vunpack.c.l.b16 %v1926
    %v1992 = vunpack.c.l.b16 %v1927
    %v1993 = vunpack.c.l.b16 %v1928
    %v1994 = vunpack.c.l.b16 %v1929
    %v1995 = vunpack.c.l.b16 %v1930
    %v1996 = vunpack.c.l.b16 %v1931
    %v1997 = vunpack.c.l.b16 %v1932
    %v1998 = vunpack.c.l.b16 %v1933
    %v1999 = vunpack.c.l.b16 %v1934
    %v2000 = vunpack.c.l.b16 %v1935
    %v2001 = vunpack.c.l.b16 %v1936
    %v2002 = vunpack.c.l.b16 %v1937
    %v2003 = vunpack.c.l.b16 %v1938
    %v2004 = vunpack.c.l.b16 %v1939
    %v2005 = vunpack.c.l.b16 %v1940
    %v2006 = vunpack.c.l.b16 %v1941
    %v2007 = vunpack.c.l.b16 %v1942
    %v2008 = vunpack.c.l.b16 %v1943
    %v2009 = vunpack.c.l.b16 %v1944
    %v2010 = vunpack.c.l.b16 %v1945
    %v2011 = vunpack.c.l.b16 %v1946
    %v2012 = vunpack.c.l.b16 %v1947
    %v2013 = vunpack.c.l.b16 %v1948
    %v2014 = vpack.c.b16 %v1983, %v1982
    %v2015 = vpack.c.b16 %v1985, %v1984
    %v2016 = vpack.c.b16 %v1987, %v1986
    %v2017 = vpack.c.b16 %v1989, %v1988
    %v2018 = vpack.c.b16 %v1991, %v1990
    %v2019 = vpack.c.b16 %v1993, %v1992
    %v2020 = vpack.c.b16 %v1995, %v1994
    %v2021 = vpack.c.b16 %v1997, %v1996
    %v2022 = vpack.c.b16 %v1999, %v1998
    %v2023 = vpack.c.b16 %v2001, %v2000
    %v2024 = vpack.c.b16 %v2003, %v2002
    %v2025 = vpack.c.b16 %v2005, %v2004
    %v2026 = vpack.c.b16 %v2007, %v2006
    %v2027 = vpack.c.b16 %v2009, %v2008
    %v2028 = vpack.c.b16 %v2011, %v2010
    %v2029 = vpack.c.b16 %v2013, %v2012
    %2046 = vmatprep.subr.bf16.mxu0 0
    %2047 = vmatpush1.bf16.msra.mxu0 %v2021
    %2048 = vmatprep.subr.bf16.mxu0 0
    %2049 = vmatpush1.bf16.msra.mxu0 %v2020
    %2050 = vmatprep.subr.bf16.mxu0 0
    %2051 = vmatpush1.bf16.msra.mxu0 %v2019
    %2052 = vmatprep.subr.bf16.mxu0 0
    %2053 = vmatpush1.bf16.msra.mxu0 %v2018
    %2054 = vmatprep.subr.bf16.mxu0 0
    %2055 = vmatpush1.bf16.msra.mxu0 %v2017
    %2056 = vmatprep.subr.bf16.mxu0 0
    %2057 = vmatpush1.bf16.msra.mxu0 %v2016
    %2058 = vmatprep.subr.bf16.mxu0 0
    %2059 = vmatpush1.bf16.msra.mxu0 %v2015
    %2060 = vmatprep.subr.bf16.mxu0 0
    %2061 = vmatpush1.bf16.msra.mxu0 %v2014
    %2062 = vmatprep.subr.bf16.mxu0 0
    %2063 = vmatpush2.bf16.msra.mxu0 %v2029
    %2064 = vmatprep.subr.bf16.mxu0 0
    %2065 = vmatpush2.bf16.msra.mxu0 %v2028
    %2066 = vmatprep.subr.bf16.mxu0 0
    %2067 = vmatpush2.bf16.msra.mxu0 %v2027
    %2068 = vmatprep.subr.bf16.mxu0 0
    %2069 = vmatpush2.bf16.msra.mxu0 %v2026
    %2070 = vmatprep.subr.bf16.mxu0 0
    %2071 = vmatpush2.bf16.msra.mxu0 %v2025
    %2072 = vmatprep.subr.bf16.mxu0 0
    %2073 = vmatpush2.bf16.msra.mxu0 %v2024
    %2074 = vmatprep.subr.bf16.mxu0 0
    %2075 = vmatpush2.bf16.msra.mxu0 %v2023
    %2076 = vmatprep.subr.bf16.mxu0 0
    %2077 = vmatpush2.bf16.msra.mxu0 %v2022
    %2078 = vmatprep.mubr.bf16.mxu0 %v1914
    %2079 = vmatmul.mubr.bf16.gmra.mxu0 %v1913
    %v2080 = vpop.f32.mrf.mxu0
    %v2081 = vadd.f32 %v1949, %v2080
    %v2082 = vpop.f32.mrf.mxu0
    %v2083 = vpop.f32.mrf.mxu0
    %v2084 = vadd.f32 %v1949, %v2083
    %v2085 = vpop.f32.mrf.mxu0
    %2086 = vmatprep.mubr.bf16.mxu0 %v1916
    %2087 = vmatmul.mubr.bf16.gmra.mxu0 %v1915
    %v2088 = vpop.f32.mrf.mxu0
    %v2089 = vadd.f32 %v1949, %v2088
    %v2090 = vpop.f32.mrf.mxu0
    %v2091 = vpop.f32.mrf.mxu0
    %v2092 = vadd.f32 %v1949, %v2091
    %v2093 = vpop.f32.mrf.mxu0
    %2094 = vdwg.mxu0
    %vm2095 = vcmp.ge.f32.partialorder %v2081, 0.0
    %vm2096 = vcmp.ge.f32.partialorder %v2084, 0.0
    %vm2097 = vcmp.ge.f32.partialorder %v2089, 0.0
    %vm2098 = vcmp.ge.f32.partialorder %v2092, 0.0
    %v2099 = vmul.f32 %v2081, 0.01
    %v2100 = vmul.f32 %v2084, 0.01
    %v2101 = vmul.f32 %v2089, 0.01
    %v2102 = vmul.f32 %v2092, 0.01
    %v2103 = vsel %vm2095, %v2081, %v2099
    %v2104 = vsel %vm2096, %v2084, %v2100
    %v2105 = vsel %vm2097, %v2089, %v2101
    %v2106 = vsel %vm2098, %v2092, %v2102
    %v2107 = vpack.c.bf16 %v2104, %v2103
    %v2108 = vpack.c.bf16 %v2106, %v2105
    %v2109 = vld [vmem:[#allocation6 + $0x140] sm:$0xf]
    %v2110 = vld [vmem:[#allocation6 + $0x144] sm:$0xf]
    %v2111 = vld [vmem:[#allocation6 + $0x148] sm:$0xf]
    %v2112 = vld [vmem:[#allocation6 + $0x14c] sm:$0xf]
    %v2113 = vld [vmem:[#allocation6 + $0x150] sm:$0xf]
    %v2114 = vld [vmem:[#allocation6 + $0x154] sm:$0xf]
    %v2115 = vld [vmem:[#allocation6 + $0x158] sm:$0xf]
    %v2116 = vld [vmem:[#allocation6 + $0x15c] sm:$0xf]
    %v2117 = vld [vmem:[#allocation6 + $0x160] sm:$0xf]
    %v2118 = vld [vmem:[#allocation6 + $0x164] sm:$0xf]
    %v2119 = vld [vmem:[#allocation6 + $0x168] sm:$0xf]
    %v2120 = vld [vmem:[#allocation6 + $0x16c] sm:$0xf]
    %v2121 = vld [vmem:[#allocation6 + $0x170] sm:$0xf]
    %v2122 = vld [vmem:[#allocation6 + $0x174] sm:$0xf]
    %v2123 = vld [vmem:[#allocation6 + $0x178] sm:$0xf]
    %v2124 = vld [vmem:[#allocation6 + $0x17c] sm:$0xf]
    %v2125 = vld [vmem:[%s4 + $0x4] ss:$0 sm:$0xff]
    %v2142 = vunpack.c.l.b16 %v2109
    %v2143 = vunpack.c.l.b16 %v2110
    %v2144 = vunpack.c.l.b16 %v2111
    %v2145 = vunpack.c.l.b16 %v2112
    %v2146 = vunpack.c.l.b16 %v2113
    %v2147 = vunpack.c.l.b16 %v2114
    %v2148 = vunpack.c.l.b16 %v2115
    %v2149 = vunpack.c.l.b16 %v2116
    %v2150 = vunpack.c.l.b16 %v2117
    %v2151 = vunpack.c.l.b16 %v2118
    %v2152 = vunpack.c.l.b16 %v2119
    %v2153 = vunpack.c.l.b16 %v2120
    %v2154 = vunpack.c.l.b16 %v2121
    %v2155 = vunpack.c.l.b16 %v2122
    %v2156 = vunpack.c.l.b16 %v2123
    %v2157 = vunpack.c.l.b16 %v2124
    %v2158 = vpack.c.b16 %v2143, %v2142
    %v2159 = vpack.c.b16 %v2145, %v2144
    %v2160 = vpack.c.b16 %v2147, %v2146
    %v2161 = vpack.c.b16 %v2149, %v2148
    %v2162 = vpack.c.b16 %v2151, %v2150
    %v2163 = vpack.c.b16 %v2153, %v2152
    %v2164 = vpack.c.b16 %v2155, %v2154
    %v2165 = vpack.c.b16 %v2157, %v2156
    %2174 = vmatprep.subr.bf16.mxu0 0
    %2175 = vmatpush1.bf16.msra.mxu0 %v2165
    %2176 = vmatprep.subr.bf16.mxu0 0
    %2177 = vmatpush1.bf16.msra.mxu0 %v2164
    %2178 = vmatprep.subr.bf16.mxu0 0
    %2179 = vmatpush1.bf16.msra.mxu0 %v2163
    %2180 = vmatprep.subr.bf16.mxu0 0
    %2181 = vmatpush1.bf16.msra.mxu0 %v2162
    %2182 = vmatprep.subr.bf16.mxu0 0
    %2183 = vmatpush1.bf16.msra.mxu0 %v2161
    %2184 = vmatprep.subr.bf16.mxu0 0
    %2185 = vmatpush1.bf16.msra.mxu0 %v2160
    %2186 = vmatprep.subr.bf16.mxu0 0
    %2187 = vmatpush1.bf16.msra.mxu0 %v2159
    %2188 = vmatprep.subr.bf16.mxu0 0
    %2189 = vmatpush1.bf16.msra.mxu0 %v2158
    %2190 = vmatprep.subr.bf16.mxu0 0
    %2191 = vmatpush2.bf16.msra.mxu0 0
    %2192 = vmatprep.subr.bf16.mxu0 0
    %2193 = vmatpush2.bf16.msra.mxu0 0
    %2194 = vmatprep.subr.bf16.mxu0 0
    %2195 = vmatpush2.bf16.msra.mxu0 0
    %2196 = vmatprep.subr.bf16.mxu0 0
    %2197 = vmatpush2.bf16.msra.mxu0 0
    %2198 = vmatprep.subr.bf16.mxu0 0
    %2199 = vmatpush2.bf16.msra.mxu0 0
    %2200 = vmatprep.subr.bf16.mxu0 0
    %2201 = vmatpush2.bf16.msra.mxu0 0
    %2202 = vmatprep.subr.bf16.mxu0 0
    %2203 = vmatpush2.bf16.msra.mxu0 0
    %2204 = vmatprep.subr.bf16.mxu0 0
    %2205 = vmatpush2.bf16.msra.mxu0 0
    %2206 = vmatprep.mubr.bf16.mxu0 0
    %2207 = vmatmul.mubr.bf16.gmra.mxu0 %v2107
    %v2208 = vpop.f32.mrf.mxu0
    %v2209 = vadd.f32 %v2125, %v2208
    %v2210 = vpop.f32.mrf.mxu0
    %v2211 = vpop.f32.mrf.mxu0
    %v2212 = vadd.f32 %v2125, %v2211
    %v2213 = vpop.f32.mrf.mxu0
    %2214 = vmatprep.mubr.bf16.mxu0 0
    %2215 = vmatmul.mubr.bf16.gmra.mxu0 %v2108
    %v2216 = vpop.f32.mrf.mxu0
    %v2217 = vadd.f32 %v2125, %v2216
    %v2218 = vpop.f32.mrf.mxu0
    %v2219 = vpop.f32.mrf.mxu0
    %v2220 = vadd.f32 %v2125, %v2219
    %v2221 = vpop.f32.mrf.mxu0
    %2222 = vdwg.mxu0
    %vm2223 = vcmp.ge.f32.partialorder %v2209, 0.0
    %vm2224 = vcmp.ge.f32.partialorder %v2212, 0.0
    %vm2225 = vcmp.ge.f32.partialorder %v2217, 0.0
    %vm2226 = vcmp.ge.f32.partialorder %v2220, 0.0
    %v2227 = vmul.f32 %v2209, 0.01
    %v2228 = vmul.f32 %v2212, 0.01
    %v2229 = vmul.f32 %v2217, 0.01
    %v2230 = vmul.f32 %v2220, 0.01
    %v2231 = vsel %vm2223, %v2209, %v2227
    %v2232 = vsel %vm2224, %v2212, %v2228
    %v2233 = vsel %vm2225, %v2217, %v2229
    %v2234 = vsel %vm2226, %v2220, %v2230
    %v2235 = vpack.c.bf16 %v2232, %v2231
    %v2236 = vpack.c.bf16 %v2234, %v2233
    %v2237 = vld [vmem:[#allocation6 + $0x1a0] sm:$0xf]
    %v2238 = vld [vmem:[#allocation6 + $0x1a4] sm:$0xf]
    %v2239 = vld [vmem:[#allocation6 + $0x1a8] sm:$0xf]
    %v2240 = vld [vmem:[#allocation6 + $0x1ac] sm:$0xf]
    %v2241 = vld [vmem:[#allocation6 + $0x1b0] sm:$0xf]
    %v2242 = vld [vmem:[#allocation6 + $0x1b4] sm:$0xf]
    %v2243 = vld [vmem:[#allocation6 + $0x1b8] sm:$0xf]
    %v2244 = vld [vmem:[#allocation6 + $0x1bc] sm:$0xf]
    %v2245 = vld [vmem:[%s4 + $0x6] ss:$0 sm:$0xff]
    %v2254 = vunpack.c.l.b16 %v2237
    %v2255 = vunpack.c.l.b16 %v2238
    %v2256 = vunpack.c.l.b16 %v2239
    %v2257 = vunpack.c.l.b16 %v2240
    %v2258 = vunpack.c.l.b16 %v2241
    %v2259 = vunpack.c.l.b16 %v2242
    %v2260 = vunpack.c.l.b16 %v2243
    %v2261 = vunpack.c.l.b16 %v2244
    %v2262 = vpack.c.b16 %v2255, %v2254
    %v2263 = vpack.c.b16 %v2257, %v2256
    %v2264 = vpack.c.b16 %v2259, %v2258
    %v2265 = vpack.c.b16 %v2261, %v2260
    %v2271 = vsel %vm1573, %v2235, 0
    %v2274 = vsel %vm1573, %v2236, 0
    %2276 = vmatprep.subr.bf16.mxu0 0
    %2277 = vmatpush1.bf16.msra.mxu0 0
    %2278 = vmatprep.subr.bf16.mxu0 0
    %2279 = vmatpush1.bf16.msra.mxu0 0
    %2280 = vmatprep.subr.bf16.mxu0 0
    %2281 = vmatpush1.bf16.msra.mxu0 0
    %2282 = vmatprep.subr.bf16.mxu0 0
    %2283 = vmatpush1.bf16.msra.mxu0 0
    %2284 = vmatprep.subr.bf16.mxu0 0
    %2285 = vmatpush1.bf16.msra.mxu0 %v2265
    %2286 = vmatprep.subr.bf16.mxu0 0
    %2287 = vmatpush1.bf16.msra.mxu0 %v2264
    %2288 = vmatprep.subr.bf16.mxu0 0
    %2289 = vmatpush1.bf16.msra.mxu0 %v2263
    %2290 = vmatprep.subr.bf16.mxu0 0
    %2291 = vmatpush1.bf16.msra.mxu0 %v2262
    %2292 = vmatprep.subr.bf16.mxu0 0
    %2293 = vmatpush2.bf16.msra.mxu0 0
    %2294 = vmatprep.subr.bf16.mxu0 0
    %2295 = vmatpush2.bf16.msra.mxu0 0
    %2296 = vmatprep.subr.bf16.mxu0 0
    %2297 = vmatpush2.bf16.msra.mxu0 0
    %2298 = vmatprep.subr.bf16.mxu0 0
    %2299 = vmatpush2.bf16.msra.mxu0 0
    %2300 = vmatprep.subr.bf16.mxu0 0
    %2301 = vmatpush2.bf16.msra.mxu0 0
    %2302 = vmatprep.subr.bf16.mxu0 0
    %2303 = vmatpush2.bf16.msra.mxu0 0
    %2304 = vmatprep.subr.bf16.mxu0 0
    %2305 = vmatpush2.bf16.msra.mxu0 0
    %2306 = vmatprep.subr.bf16.mxu0 0
    %2307 = vmatpush2.bf16.msra.mxu0 0
    %2308 = vmatprep.mubr.bf16.mxu0 0
    %2309 = vmatmul.mubr.bf16.gmra.mxu0 %v2271
    %v2310 = vpop.f32.mrf.mxu0
    %v2311 = vadd.f32 %v2245, %v2310
    %v2312 = vpop.f32.mrf.mxu0
    %v2313 = vpop.f32.mrf.mxu0
    %v2314 = vadd.f32 %v2245, %v2313
    %v2315 = vpop.f32.mrf.mxu0
    %2316 = vmatprep.mubr.bf16.mxu0 0
    %2317 = vmatmul.mubr.bf16.gmra.mxu0 %v2274
    %v2318 = vpop.f32.mrf.mxu0
    %v2319 = vadd.f32 %v2245, %v2318
    %v2320 = vpop.f32.mrf.mxu0
    %v2321 = vpop.f32.mrf.mxu0
    %v2322 = vadd.f32 %v2245, %v2321
    %v2323 = vpop.f32.mrf.mxu0
    %2324 = vdwg.mxu0
    %vm2325 = vcmp.ge.f32.partialorder %v2311, 0.0
    %vm2326 = vcmp.ge.f32.partialorder %v2314, 0.0
    %vm2327 = vcmp.ge.f32.partialorder %v2319, 0.0
    %vm2328 = vcmp.ge.f32.partialorder %v2322, 0.0
    %v2329 = vmul.f32 %v2311, 0.01
    %v2330 = vmul.f32 %v2314, 0.01
    %v2331 = vmul.f32 %v2319, 0.01
    %v2332 = vmul.f32 %v2322, 0.01
    %v2333 = vsel %vm2325, %v2311, %v2329
    %v2334 = vsel %vm2326, %v2314, %v2330
    %v2335 = vsel %vm2327, %v2319, %v2331
    %v2336 = vsel %vm2328, %v2322, %v2332
    %v2337 = vpack.c.bf16 %v2334, %v2333
    %v2338 = vpack.c.bf16 %v2336, %v2335
    %v2339 = vld [vmem:[#allocation6 + $0x1d0] sm:$0xf]
    %v2340 = vld [vmem:[#allocation6 + $0x1d4] sm:$0xf]
    %v2341 = vld [vmem:[#allocation6 + $0x1d8] sm:$0xf]
    %v2342 = vld [vmem:[#allocation6 + $0x1dc] sm:$0xf]
    %v2343 = vld [vmem:[%s4 + $0x20] ss:$0 sm:$0xff]
    %v2348 = vunpack.c.l.b16 %v2339
    %v2349 = vunpack.c.l.b16 %v2340
    %v2350 = vunpack.c.l.b16 %v2341
    %v2351 = vunpack.c.l.b16 %v2342
    %v2352 = vpack.c.b16 %v2349, %v2348
    %v2353 = vpack.c.b16 %v2351, %v2350
    %v2357 = vsel %vm1660, %v2337, 0
    %v2360 = vsel %vm1660, %v2338, 0
    %2362 = vmatprep.subr.bf16.mxu0 0
    %2363 = vmatpush1.bf16.msra.mxu0 0
    %2364 = vmatprep.subr.bf16.mxu0 0
    %2365 = vmatpush1.bf16.msra.mxu0 0
    %2366 = vmatprep.subr.bf16.mxu0 0
    %2367 = vmatpush1.bf16.msra.mxu0 0
    %2368 = vmatprep.subr.bf16.mxu0 0
    %2369 = vmatpush1.bf16.msra.mxu0 0
    %2370 = vmatprep.subr.bf16.mxu0 0
    %2371 = vmatpush1.bf16.msra.mxu0 0
    %2372 = vmatprep.subr.bf16.mxu0 0
    %2373 = vmatpush1.bf16.msra.mxu0 0
    %2374 = vmatprep.subr.bf16.mxu0 0
    %2375 = vmatpush1.bf16.msra.mxu0 %v2353
    %2376 = vmatprep.subr.bf16.mxu0 0
    %2377 = vmatpush1.bf16.msra.mxu0 %v2352
    %2378 = vmatprep.subr.bf16.mxu0 0
    %2379 = vmatpush2.bf16.msra.mxu0 0
    %2380 = vmatprep.subr.bf16.mxu0 0
    %2381 = vmatpush2.bf16.msra.mxu0 0
    %2382 = vmatprep.subr.bf16.mxu0 0
    %2383 = vmatpush2.bf16.msra.mxu0 0
    %2384 = vmatprep.subr.bf16.mxu0 0
    %2385 = vmatpush2.bf16.msra.mxu0 0
    %2386 = vmatprep.subr.bf16.mxu0 0
    %2387 = vmatpush2.bf16.msra.mxu0 0
    %2388 = vmatprep.subr.bf16.mxu0 0
    %2389 = vmatpush2.bf16.msra.mxu0 0
    %2390 = vmatprep.subr.bf16.mxu0 0
    %2391 = vmatpush2.bf16.msra.mxu0 0
    %2392 = vmatprep.subr.bf16.mxu0 0
    %2393 = vmatpush2.bf16.msra.mxu0 0
    %2394 = vmatprep.mubr.bf16.mxu0 0
    %2395 = vmatmul.mubr.bf16.gmra.mxu0 %v2357
    %v2396 = vpop.f32.mrf.mxu0
    %v2397 = vadd.f32 %v2343, %v2396
    %v2398 = vpop.f32.mrf.mxu0
    %v2399 = vpop.f32.mrf.mxu0
    %v2400 = vadd.f32 %v2343, %v2399
    %v2401 = vpop.f32.mrf.mxu0
    %2402 = vmatprep.mubr.bf16.mxu0 0
    %2403 = vmatmul.mubr.bf16.gmra.mxu0 %v2360
    %v2404 = vpop.f32.mrf.mxu0
    %v2405 = vadd.f32 %v2343, %v2404
    %v2406 = vpop.f32.mrf.mxu0
    %v2407 = vpop.f32.mrf.mxu0
    %v2408 = vadd.f32 %v2343, %v2407
    %v2409 = vpop.f32.mrf.mxu0
    %2410 = vdwg.mxu0
    %2412 = vrot.lane.b32.xlu0 %v2400, 1
    %v2413 = vpop.permute.xlu0 %2412
    %2416 = vrot.lane.b32.xlu0 %v2405, 2
    %v2417 = vpop.permute.xlu0 %2416
    %2420 = vrot.lane.b32.xlu0 %v2408, 3
    %v2421 = vpop.permute.xlu0 %2420
    %vm2423 = vcmask 7168
    %v2424 = vsel %vm2423, %v2397, %v2413
    %vm2425 = vcmask 15360
    %v2426 = vsel %vm2425, %v2424, %v2417
    %vm2427 = vcmask 23552
    %v2428 = vsel %vm2427, %v2426, %v2421
    %v2429 = vsel %vm1757, %v2428, -inf
    %2430 = vmax.xlane.f32.xlu0 %v2429
    %v2431 = vpop.xlane.xlu0 %2430
    %v2432 = vsub.f32 %v2428, %v2431
    %v2433 = vmul.f32 %v2432, 1.442695
    %v2434 = vpow.pop %v2433
    %v2435 = vsel %vm1757, %v2434, 0.0
    %2436 = vadd.xlane.f32.xlu0 %v2435
    %v2437 = vpop.xlane.xlu0 %2436
    %v2438 = vrcp.pop %v2437
    %v2439 = vmul.f32 %v2434, %v2438
    %s2440 = sld [smem:[#allocation2]]
    %v2441 = vstv %s2440
    %v2442 = vadd.f32 %v1702, %v2441
    %s2443 = sld [smem:[#allocation2 + $0x80]]
    %v2444 = vstv %s2443
    %v2445 = vadd.f32 %v1705, %v2444
    %s2446 = sld [smem:[#allocation2 + $0x100]]
    %v2447 = vstv %s2446
    %v2448 = vadd.f32 %v1710, %v2447
    %s2449 = sld [smem:[#allocation2 + $0x180]]
    %v2450 = vstv %s2449
    %v2451 = vadd.f32 %v1713, %v2450
    %2453 = vrot.lane.b32.xlu0 %v2445, 1
    %v2454 = vpop.permute.xlu0 %2453
    %2457 = vrot.lane.b32.xlu0 %v2448, 2
    %v2458 = vpop.permute.xlu0 %2457
    %2461 = vrot.lane.b32.xlu0 %v2451, 3
    %v2462 = vpop.permute.xlu0 %2461
    %v2464 = vsel %vm2423, %v2442, %v2454
    %v2465 = vsel %vm2425, %v2464, %v2458
    %v2466 = vsel %vm2427, %v2465, %v2462
    %s2467 = sld [smem:[#allocation2 + $0x1]]
    %v2468 = vstv %s2467
    %v2469 = vadd.f32 %v1702, %v2468
    %s2470 = sld [smem:[#allocation2 + $0x81]]
    %v2471 = vstv %s2470
    %v2472 = vadd.f32 %v1705, %v2471
    %s2473 = sld [smem:[#allocation2 + $0x101]]
    %v2474 = vstv %s2473
    %v2475 = vadd.f32 %v1710, %v2474
    %s2476 = sld [smem:[#allocation2 + $0x181]]
    %v2477 = vstv %s2476
    %v2478 = vadd.f32 %v1713, %v2477
    %2480 = vrot.lane.b32.xlu0 %v2469, 127
    %v2481 = vpop.permute.xlu0 %2480
    %2484 = vrot.lane.b32.xlu0 %v2475, 1
    %v2485 = vpop.permute.xlu0 %2484
    %2488 = vrot.lane.b32.xlu0 %v2478, 2
    %v2489 = vpop.permute.xlu0 %2488
    %v2491 = vsel %vm2423, %v2481, %v2472
    %v2492 = vsel %vm2425, %v2491, %v2485
    %v2493 = vsel %vm2427, %v2492, %v2489
    %v2494 = vmul.f32 %v2439, %v2466
    %v2495 = vsel %vm1757, %v2494, 0.0
    %2496 = vadd.xlane.f32.xlu0 %v2495
    %v2497 = vpop.xlane.xlu0 %2496
    %v2498 = vmul.f32 %v2439, %v2493
    %v2499 = vsel %vm1757, %v2498, 0.0
    %2500 = vadd.xlane.f32.xlu0 %v2499
    %v2501 = vpop.xlane.xlu0 %2500
    %v2502 = vsel %vm2423, %v2497, %v2501
    %2503 = vst.msk [vmem:[%s5] sm:$0xff] %vm2425, %v2502
    // Predicated region
    $region34: #{sfo_forward.1} parent=1 // pred_check
      _
    $region35: #{sfo_forward.1} parent=1 // pred_check_branch
      %2505 = sbr.rel (0) target = $region37
    $region36: #{sfo_forward.1} parent=1 // pred_region
      _
    $region37: #{sfo_forward.1} parent=1 // pred_fallthru
      _
    // Predicated region
    $region38: #{sfo_forward.1} parent=1 // pred_check
      _
    $region39: #{sfo_forward.1} parent=1 // pred_check_branch
      %2507 = sbr.rel (0) target = $region41
    $region40: #{sfo_forward.1} parent=1 // pred_region
      _
    $region41: #{sfo_forward.1} parent=1 // pred_fallthru
      _
    // Predicated region
    $region42: #{sfo_forward.1} parent=1 // pred_check
      _
    $region43: #{sfo_forward.1} parent=1 // pred_check_branch
      %2509 = sbr.rel (0) target = $region45
    $region44: #{sfo_forward.1} parent=1 // pred_region
      _
    $region45: #{sfo_forward.1} parent=1 // pred_fallthru
      _
    // Predicated region
    $region46: #{sfo_forward.1} parent=1 // pred_check
      _
    $region47: #{sfo_forward.1} parent=1 // pred_check_branch
      %2511 = sbr.rel (0) target = $region49
    $region48: #{sfo_forward.1} parent=1 // pred_region
      _
    $region49: #{sfo_forward.1} parent=1 // pred_fallthru
      _
    %2512 = vsyncpa [#allocation3], 1
    %2513 = vsyncpa [#allocation7], 1
    %2514 = vsyncpa [#allocation4], 1

</llo_original>
